<compile_context>
chip_gen: v7x
topology: tpu7x:2x2x1
jax: 0.10.0
libtpu: 0.0.40
codegen_flags: <defaults>
</compile_context>

<pallas_src>
import functools
import math

import jax
import jax.numpy as jnp
from jax.experimental import pallas as pl
from jax.experimental.pallas import tpu as pltpu

LN_EPS = 1e-5  # torch.nn.LayerNorm default


def _layer_norm(x, w, b):
    mean = jnp.mean(x, axis=-1, keepdims=True)
    c = x - mean
    var = jnp.mean(c * c, axis=-1, keepdims=True)
    return c * jax.lax.rsqrt(var + LN_EPS) * w + b


def _erf_poly(x):
    # Abramowitz & Stegun 7.1.26 (|error| <= 1.5e-7), odd extension for x < 0.
    # The divide is moved to the EUP via pl.reciprocal (frees the VALU slot).
    a1, a2, a3, a4, a5 = (0.254829592, -0.284496736, 1.421413741,
                          -1.453152027, 1.061405429)
    p = 0.3275911
    ax = jnp.abs(x)
    t = pl.reciprocal(1.0 + p * ax, approx=True)
    poly = ((((a5 * t + a4) * t + a3) * t + a2) * t + a1) * t
    y = 1.0 - poly * jnp.exp(-ax * ax)
    return jnp.where(x >= 0, y, -y)


def _gelu_exact(x):
    # torch.nn.GELU() default: 0.5 * x * (1 + erf(x / sqrt(2)))
    # TODO(synk): switch to jax.lax.erf (single EUP op) once confirmed to lower in Mosaic.
    return 0.5 * x * (1.0 + _erf_poly(x * (1.0 / math.sqrt(2.0))))


def _dencoder_block_kernel(x_ref,
                           n1w_ref, n1b_ref,
                           wq_ref, wk_ref, wv_ref,
                           wproj_ref, bproj_ref,
                           n2w_ref, n2b_ref,
                           w1_ref, b1_ref,
                           w2_ref, b2_ref,
                           out_ref,
                           *, num_heads, head_dim):
    f32 = jnp.float32
    cdt = wq_ref.dtype              # MXU operand dtype (bf16 fast path / f32 exact path)
    x = x_ref[...].astype(f32)      # (N, C): one batch element, full sequence
    n_tok = x.shape[0]
    dim = num_heads * head_dim

    # ---------------- attention branch (softmax scale pre-folded into W_q) ----------------
    x1 = _layer_norm(x, n1w_ref[...].astype(f32), n1b_ref[...].astype(f32))
    x1c = x1.astype(cdt)
    q = jnp.dot(x1c, wq_ref[...], preferred_element_type=f32)   # (N, C)
    k = jnp.dot(x1c, wk_ref[...], preferred_element_type=f32)   # (N, C)
    v = jnp.dot(x1c, wv_ref[...], preferred_element_type=f32)   # (N, C)

    def split_heads(t):             # (N, C) -> (H, N, head_dim)
        return jnp.transpose(t.reshape(n_tok, num_heads, head_dim), (1, 0, 2))

    qh = split_heads(q).astype(cdt)
    kh = split_heads(k).astype(cdt)
    vh = split_heads(v).astype(cdt)

    # Head-batched score / context matmuls.
    s = jnp.einsum("hqd,hkd->hqk", qh, kh, preferred_element_type=f32)   # (H, N, N)
    s = s - jnp.max(s, axis=-1, keepdims=True)
    p = jnp.exp(s)
    p = p * pl.reciprocal(jnp.sum(p, axis=-1, keepdims=True), approx=True)
    ctx = jnp.einsum("hqk,hkd->hqd", p.astype(cdt), vh,
                     preferred_element_type=f32)                          # (H, N, hd)
    ctx = jnp.transpose(ctx, (1, 0, 2)).reshape(n_tok, dim)               # (N, C)

    # Single K=C output projection (replaces the per-head K=head_dim matmuls).
    proj = jnp.dot(ctx.astype(cdt), wproj_ref[...], preferred_element_type=f32)
    x = x + proj + bproj_ref[...].astype(f32)                             # residual 1

    # ---------------- MLP branch ----------------
    x2 = _layer_norm(x, n2w_ref[...].astype(f32), n2b_ref[...].astype(f32))
    h = jnp.dot(x2.astype(cdt), w1_ref[...], preferred_element_type=f32)
    h = _gelu_exact(h + b1_ref[...].astype(f32))
    h = jnp.dot(h.astype(cdt), w2_ref[...], preferred_element_type=f32)
    out_ref[...] = (x + h + b2_ref[...].astype(f32)).astype(out_ref.dtype)  # residual 2


def _vmem_limit_bytes() -> int:
    # Generation-aware VMEM budget: ~85% of physical, capped at 112 MiB.
    # v7x: 64 MiB/TC -> ~54 MiB; v5e/v6e: 128 MiB -> ~108 MiB.
    cap = 64 * 1024 * 1024
    try:
        info = pltpu.get_tpu_info()
        cap = int(getattr(info, "vmem_capacity_bytes", cap))
    except Exception:
        pass
    return min(int(cap * 0.85), 112 * 1024 * 1024)


def dencoder_block_forward(x, params, *, num_heads, matmul_dtype=jnp.bfloat16):
    """x: (B, N, C). Linear weights in params are stored (in, out) = torch W^T.

    matmul_dtype: dtype of the MXU operands (weights cast once here, activations
    cast in-kernel right before each dot); accumulation is always f32.
    """
    B, N, C = x.shape
    assert C % num_heads == 0
    head_dim = C // num_heads
    hid = params["w1"].shape[1]
    f32 = jnp.float32

    # One-time weight transforms (done outside the kernel, not per-token work):
    wqkv = params["wqkv"].astype(f32)
    wq = (wqkv[:, :C] * (head_dim ** -0.5)).astype(matmul_dtype)  # fold softmax scale
    wk = wqkv[:, C:2 * C].astype(matmul_dtype)
    wv = wqkv[:, 2 * C:].astype(matmul_dtype)
    wproj = params["wproj"].astype(matmul_dtype)
    w1 = params["w1"].astype(matmul_dtype)
    w2 = params["w2"].astype(matmul_dtype)

    kernel = functools.partial(_dencoder_block_kernel,
                               num_heads=num_heads, head_dim=head_dim)

    def resident(shape):
        # Full-array block, constant index_map -> DMA'd once, stays resident in VMEM.
        # TODO(synk): single-buffer these on v7x via pipeline_mode=pl.Buffered(1)
        # once that path is verified for the grid pipeline.
        nd = len(shape)
        return pl.BlockSpec(shape, lambda b, _nd=nd: (0,) * _nd)

    out = pl.pallas_call(
        kernel,
        out_shape=jax.ShapeDtypeStruct((B, N, C), x.dtype),
        grid=(B,),
        in_specs=[
            pl.BlockSpec((None, N, C), lambda b: (b, 0, 0)),       # x  (per-batch tile)
            resident((1, C)), resident((1, C)),                    # norm1 weight, bias
            resident((C, C)), resident((C, C)), resident((C, C)),  # W_q, W_k, W_v
            resident((C, C)), resident((1, C)),                    # W_proj, b_proj
            resident((1, C)), resident((1, C)),                    # norm2 weight, bias
            resident((C, hid)), resident((1, hid)),                # W_mlp1, b_mlp1
            resident((hid, C)), resident((1, C)),                  # W_mlp2, b_mlp2
        ],
        out_specs=pl.BlockSpec((None, N, C), lambda b: (b, 0, 0)),
        compiler_params=pltpu.CompilerParams(
            dimension_semantics=("parallel",),
            vmem_limit_bytes=_vmem_limit_bytes(),
        ),
    )(
        x,
        params["n1w"].reshape(1, C).astype(f32), params["n1b"].reshape(1, C).astype(f32),
        wq, wk, wv,
        wproj, params["bproj"].reshape(1, C).astype(f32),
        params["n2w"].reshape(1, C).astype(f32), params["n2b"].reshape(1, C).astype(f32),
        w1, params["b1"].reshape(1, hid).astype(f32),
        w2, params["b2"].reshape(1, C).astype(f32),
    )
    return out


def dencoder_block_reference(x, params, *, num_heads):
    """Pure-JAX reference matching the PyTorch DEncoderBlock forward."""
    B, N, C = x.shape
    hd = C // num_heads
    hp = jax.lax.Precision.HIGHEST

    def ln(v, w, b):
        m = jnp.mean(v, axis=-1, keepdims=True)
        var = jnp.mean((v - m) ** 2, axis=-1, keepdims=True)
        return (v - m) / jnp.sqrt(var + LN_EPS) * w + b

    x1 = ln(x, params["n1w"], params["n1b"])
    qkv = jnp.einsum("bnc,cd->bnd", x1, params["wqkv"], precision=hp)
    qkv = qkv.reshape(B, N, 3, num_heads, hd).transpose(2, 0, 3, 1, 4)
    q, k, v = qkv[0], qkv[1], qkv[2]
    q = q * hd ** -0.5
    attn = jnp.einsum("bhqd,bhkd->bhqk", q, k, precision=hp)
    attn = jax.nn.softmax(attn, axis=-1)
    o = jnp.einsum("bhqk,bhkd->bhqd", attn, v, precision=hp)
    o = o.transpose(0, 2, 1, 3).reshape(B, N, C)
    o = jnp.einsum("bnc,cd->bnd", o, params["wproj"], precision=hp) + params["bproj"]
    x = x + o
    x2 = ln(x, params["n2w"], params["n2b"])
    h = jnp.einsum("bnc,ch->bnh", x2, params["w1"], precision=hp) + params["b1"]
    h = 0.5 * h * (1.0 + jax.lax.erf(h / math.sqrt(2.0)))   # exact GELU
    h = jnp.einsum("bnh,hc->bnc", h, params["w2"], precision=hp) + params["b2"]
    return x + h


if __name__ == "__main__":
    key = jax.random.PRNGKey(0)
    ks = jax.random.split(key, 8)

    B, N, C = 2, 8, 32       # batch, tokens, dim
    num_heads = 4            # DEncoderBlock default
    mlp_ratio = 4
    hid = C * mlp_ratio

    x = jax.random.normal(ks[0], (B, N, C), dtype=jnp.float32)

    def w_init(k, shape, fan_in):
        return jax.random.normal(k, shape, dtype=jnp.float32) / math.sqrt(fan_in)

    params = {
        # LayerNorm params (torch init: weight=1, bias=0)
        "n1w": jnp.ones((C,), jnp.float32), "n1b": jnp.zeros((C,), jnp.float32),
        "n2w": jnp.ones((C,), jnp.float32), "n2b": jnp.zeros((C,), jnp.float32),
        # Linear weights stored (in, out) = torch weight transposed.
        "wqkv": w_init(ks[1], (C, 3 * C), C),                       # qkv: bias=False
        "wproj": w_init(ks[2], (C, C), C),
        "bproj": 0.1 * jax.random.normal(ks[3], (C,), jnp.float32),
        "w1": w_init(ks[4], (C, hid), C),
        "b1": 0.1 * jax.random.normal(ks[5], (hid,), jnp.float32),
        "w2": w_init(ks[6], (hid, C), hid),
        "b2": 0.1 * jax.random.normal(ks[7], (C,), jnp.float32),
    }

    ref = dencoder_block_reference(x, params, num_heads=num_heads)

    # Exact path (f32 MXU operands): validates the fused math tightly.
    out_f32 = jax.block_until_ready(
        dencoder_block_forward(x, params, num_heads=num_heads,
                               matmul_dtype=jnp.float32))
    assert out_f32.shape == (B, N, C)
    err32 = float(jnp.max(jnp.abs(out_f32 - ref)))
    assert jnp.allclose(out_f32, ref, atol=5e-3, rtol=5e-3), f"f32 max abs err = {err32}"

    # Fast path (bf16 MXU operands, f32 accumulation): the deployment configuration.
    out_bf16 = jax.block_until_ready(
        dencoder_block_forward(x, params, num_heads=num_heads,
                               matmul_dtype=jnp.bfloat16))
    errbf = float(jnp.max(jnp.abs(out_bf16 - ref)))
    assert jnp.allclose(out_bf16, ref, atol=5e-2, rtol=5e-2), f"bf16 max abs err = {errbf}"

    print("KERNEL_OK")
</pallas_src>

<mosaic_0001>
module attributes {stable_mosaic.version = 11 : i64} {
  func.func @_dencoder_block_kernel(%arg0: i32, %arg1: memref<1x8x32xf32, #tpu.memory_space<vmem>>, %arg2: memref<1x32xf32, #tpu.memory_space<vmem>>, %arg3: memref<1x32xf32, #tpu.memory_space<vmem>>, %arg4: memref<32x32xf32, #tpu.memory_space<vmem>>, %arg5: memref<32x32xf32, #tpu.memory_space<vmem>>, %arg6: memref<32x32xf32, #tpu.memory_space<vmem>>, %arg7: memref<32x32xf32, #tpu.memory_space<vmem>>, %arg8: memref<1x32xf32, #tpu.memory_space<vmem>>, %arg9: memref<1x32xf32, #tpu.memory_space<vmem>>, %arg10: memref<1x32xf32, #tpu.memory_space<vmem>>, %arg11: memref<32x128xf32, #tpu.memory_space<vmem>>, %arg12: memref<1x128xf32, #tpu.memory_space<vmem>>, %arg13: memref<128x32xf32, #tpu.memory_space<vmem>>, %arg14: memref<1x32xf32, #tpu.memory_space<vmem>>, %arg15: memref<1x8x32xf32, #tpu.memory_space<vmem>>) attributes {dimension_semantics = [#tpu.dimension_semantics<parallel>], iteration_bounds = array<i64: 2>, scalar_prefetch = 0 : i64, scratch_operands = 0 : i64, tpu.core_type = #tpu.core_type<tc>, window_params = [{transform_indices = @transform_0, window_bounds = array<i64: 1, 8, 32>}, {pipeline_mode = #tpu.pipeline_mode<synchronous>, transform_indices = @transform_1, window_bounds = array<i64: 1, 32>}, {pipeline_mode = #tpu.pipeline_mode<synchronous>, transform_indices = @transform_2, window_bounds = array<i64: 1, 32>}, {pipeline_mode = #tpu.pipeline_mode<synchronous>, transform_indices = @transform_3, window_bounds = array<i64: 32, 32>}, {pipeline_mode = #tpu.pipeline_mode<synchronous>, transform_indices = @transform_4, window_bounds = array<i64: 32, 32>}, {pipeline_mode = #tpu.pipeline_mode<synchronous>, transform_indices = @transform_5, window_bounds = array<i64: 32, 32>}, {pipeline_mode = #tpu.pipeline_mode<synchronous>, transform_indices = @transform_6, window_bounds = array<i64: 32, 32>}, {pipeline_mode = #tpu.pipeline_mode<synchronous>, transform_indices = @transform_7, window_bounds = array<i64: 1, 32>}, {pipeline_mode = #tpu.pipeline_mode<synchronous>, transform_indices = @transform_8, window_bounds = array<i64: 1, 32>}, {pipeline_mode = #tpu.pipeline_mode<synchronous>, transform_indices = @transform_9, window_bounds = array<i64: 1, 32>}, {pipeline_mode = #tpu.pipeline_mode<synchronous>, transform_indices = @transform_10, window_bounds = array<i64: 32, 128>}, {pipeline_mode = #tpu.pipeline_mode<synchronous>, transform_indices = @transform_11, window_bounds = array<i64: 1, 128>}, {pipeline_mode = #tpu.pipeline_mode<synchronous>, transform_indices = @transform_12, window_bounds = array<i64: 128, 32>}, {pipeline_mode = #tpu.pipeline_mode<synchronous>, transform_indices = @transform_13, window_bounds = array<i64: 1, 32>}, {transform_indices = @transform_14, window_bounds = array<i64: 1, 8, 32>}]} {
    %c0 = arith.constant 0 : index
    %c0_0 = arith.constant 0 : index
    %c0_1 = arith.constant 0 : index
    %0 = vector.load %arg1[%c0, %c0_0, %c0_1] : memref<1x8x32xf32, #tpu.memory_space<vmem>>, vector<1x8x32xf32>
    %1 = vector.shape_cast %0 : vector<1x8x32xf32> to vector<8x32xf32>
    %c0_2 = arith.constant 0 : index
    %c0_3 = arith.constant 0 : index
    %2 = vector.load %arg2[%c0_2, %c0_3] : memref<1x32xf32, #tpu.memory_space<vmem>>, vector<1x32xf32>
    %c0_4 = arith.constant 0 : index
    %c0_5 = arith.constant 0 : index
    %3 = vector.load %arg3[%c0_4, %c0_5] : memref<1x32xf32, #tpu.memory_space<vmem>>, vector<1x32xf32>
    %cst = arith.constant dense<0.000000e+00> : vector<8xf32>
    %4 = vector.multi_reduction <add>, %1, %cst [1] : vector<8x32xf32> to vector<8xf32>
    %5 = vector.shape_cast %4 : vector<8xf32> to vector<8x1xf32>
    %cst_6 = arith.constant 3.200000e+01 : f32
    %6 = vector.broadcast %cst_6 : f32 to vector<8x1xf32>
    %7 = arith.divf %5, %6 : vector<8x1xf32>
    %8 = vector.broadcast %7 : vector<8x1xf32> to vector<8x32xf32>
    %9 = arith.subf %1, %8 : vector<8x32xf32>
    %10 = arith.mulf %9, %9 : vector<8x32xf32>
    %cst_7 = arith.constant dense<0.000000e+00> : vector<8xf32>
    %11 = vector.multi_reduction <add>, %10, %cst_7 [1] : vector<8x32xf32> to vector<8xf32>
    %12 = vector.shape_cast %11 : vector<8xf32> to vector<8x1xf32>
    %cst_8 = arith.constant 3.200000e+01 : f32
    %13 = vector.broadcast %cst_8 : f32 to vector<8x1xf32>
    %14 = arith.divf %12, %13 : vector<8x1xf32>
    %cst_9 = arith.constant 9.99999974E-6 : f32
    %15 = vector.broadcast %cst_9 : f32 to vector<8x1xf32>
    %16 = arith.addf %14, %15 : vector<8x1xf32>
    %17 = math.rsqrt %16 : vector<8x1xf32>
    %18 = vector.broadcast %17 : vector<8x1xf32> to vector<8x32xf32>
    %19 = arith.mulf %9, %18 : vector<8x32xf32>
    %20 = vector.broadcast %2 : vector<1x32xf32> to vector<8x32xf32>
    %21 = arith.mulf %19, %20 : vector<8x32xf32>
    %22 = vector.broadcast %3 : vector<1x32xf32> to vector<8x32xf32>
    %23 = arith.addf %21, %22 : vector<8x32xf32>
    %c0_10 = arith.constant 0 : index
    %c0_11 = arith.constant 0 : index
    %24 = vector.load %arg4[%c0_10, %c0_11] : memref<32x32xf32, #tpu.memory_space<vmem>>, vector<32x32xf32>
    %cst_12 = arith.constant dense<0.000000e+00> : vector<8x32xf32>
    %25 = tpu.matmul %23, %24, %cst_12 {dimension_numbers = #tpu.dot_dimension_numbers<[1], [0], [0], [1], [0, 0, 1, 1], [], []>} : vector<8x32xf32>, vector<32x32xf32>, vector<8x32xf32> -> vector<8x32xf32>
    %c0_13 = arith.constant 0 : index
    %c0_14 = arith.constant 0 : index
    %26 = vector.load %arg5[%c0_13, %c0_14] : memref<32x32xf32, #tpu.memory_space<vmem>>, vector<32x32xf32>
    %cst_15 = arith.constant dense<0.000000e+00> : vector<8x32xf32>
    %27 = tpu.matmul %23, %26, %cst_15 {dimension_numbers = #tpu.dot_dimension_numbers<[1], [0], [0], [1], [0, 0, 1, 1], [], []>} : vector<8x32xf32>, vector<32x32xf32>, vector<8x32xf32> -> vector<8x32xf32>
    %c0_16 = arith.constant 0 : index
    %c0_17 = arith.constant 0 : index
    %28 = vector.load %arg6[%c0_16, %c0_17] : memref<32x32xf32, #tpu.memory_space<vmem>>, vector<32x32xf32>
    %cst_18 = arith.constant dense<0.000000e+00> : vector<8x32xf32>
    %29 = tpu.matmul %23, %28, %cst_18 {dimension_numbers = #tpu.dot_dimension_numbers<[1], [0], [0], [1], [0, 0, 1, 1], [], []>} : vector<8x32xf32>, vector<32x32xf32>, vector<8x32xf32> -> vector<8x32xf32>
    %30 = vector.shape_cast %25 : vector<8x32xf32> to vector<8x4x8xf32>
    %31 = tpu.transpose %30, [1, 0, 2] : vector<8x4x8xf32> -> vector<4x8x8xf32>
    %32 = vector.shape_cast %27 : vector<8x32xf32> to vector<8x4x8xf32>
    %33 = tpu.transpose %32, [1, 0, 2] : vector<8x4x8xf32> -> vector<4x8x8xf32>
    %34 = vector.shape_cast %29 : vector<8x32xf32> to vector<8x4x8xf32>
    %35 = tpu.transpose %34, [1, 0, 2] : vector<8x4x8xf32> -> vector<4x8x8xf32>
    "tpu.trace_start"() <{level = 10 : i32, message = "hqd,hkd->hqk"}> : () -> ()
    %cst_19 = arith.constant dense<0.000000e+00> : vector<4x8x8xf32>
    %36 = tpu.matmul %31, %33, %cst_19 {dimension_numbers = #tpu.dot_dimension_numbers<[2], [2], [1], [1], [0, 0, 0, 1, 1, 1], [0], [0]>} : vector<4x8x8xf32>, vector<4x8x8xf32>, vector<4x8x8xf32> -> vector<4x8x8xf32>
    "tpu.trace_stop"() : () -> ()
    %cst_20 = arith.constant dense<0xFF800000> : vector<4x8xf32>
    %37 = vector.multi_reduction <maximumf>, %36, %cst_20 [2] : vector<4x8x8xf32> to vector<4x8xf32>
    %38 = vector.shape_cast %37 : vector<4x8xf32> to vector<4x8x1xf32>
    %39 = vector.broadcast %38 : vector<4x8x1xf32> to vector<4x8x8xf32>
    %40 = arith.subf %36, %39 : vector<4x8x8xf32>
    %41 = math.exp %40 : vector<4x8x8xf32>
    %cst_21 = arith.constant dense<0.000000e+00> : vector<4x8xf32>
    %42 = vector.multi_reduction <add>, %41, %cst_21 [2] : vector<4x8x8xf32> to vector<4x8xf32>
    %43 = vector.shape_cast %42 : vector<4x8xf32> to vector<4x8x1xf32>
    %44 = tpu.reciprocal %43 {approx = true} : vector<4x8x1xf32> -> vector<4x8x1xf32>
    %45 = vector.broadcast %44 : vector<4x8x1xf32> to vector<4x8x8xf32>
    %46 = arith.mulf %41, %45 : vector<4x8x8xf32>
    "tpu.trace_start"() <{level = 10 : i32, message = "hqk,hkd->hqd"}> : () -> ()
    %cst_22 = arith.constant dense<0.000000e+00> : vector<4x8x8xf32>
    %47 = tpu.matmul %46, %35, %cst_22 {dimension_numbers = #tpu.dot_dimension_numbers<[2], [1], [1], [2], [0, 0, 0, 1, 1, 2], [0], [0]>} : vector<4x8x8xf32>, vector<4x8x8xf32>, vector<4x8x8xf32> -> vector<4x8x8xf32>
    "tpu.trace_stop"() : () -> ()
    %48 = tpu.transpose %47, [1, 0, 2] : vector<4x8x8xf32> -> vector<8x4x8xf32>
    %49 = vector.shape_cast %48 : vector<8x4x8xf32> to vector<8x32xf32>
    %c0_23 = arith.constant 0 : index
    %c0_24 = arith.constant 0 : index
    %50 = vector.load %arg7[%c0_23, %c0_24] : memref<32x32xf32, #tpu.memory_space<vmem>>, vector<32x32xf32>
    %cst_25 = arith.constant dense<0.000000e+00> : vector<8x32xf32>
    %51 = tpu.matmul %49, %50, %cst_25 {dimension_numbers = #tpu.dot_dimension_numbers<[1], [0], [0], [1], [0, 0, 1, 1], [], []>} : vector<8x32xf32>, vector<32x32xf32>, vector<8x32xf32> -> vector<8x32xf32>
    %52 = arith.addf %1, %51 : vector<8x32xf32>
    %c0_26 = arith.constant 0 : index
    %c0_27 = arith.constant 0 : index
    %53 = vector.load %arg8[%c0_26, %c0_27] : memref<1x32xf32, #tpu.memory_space<vmem>>, vector<1x32xf32>
    %54 = vector.broadcast %53 : vector<1x32xf32> to vector<8x32xf32>
    %55 = arith.addf %52, %54 : vector<8x32xf32>
    %c0_28 = arith.constant 0 : index
    %c0_29 = arith.constant 0 : index
    %56 = vector.load %arg9[%c0_28, %c0_29] : memref<1x32xf32, #tpu.memory_space<vmem>>, vector<1x32xf32>
    %c0_30 = arith.constant 0 : index
    %c0_31 = arith.constant 0 : index
    %57 = vector.load %arg10[%c0_30, %c0_31] : memref<1x32xf32, #tpu.memory_space<vmem>>, vector<1x32xf32>
    %cst_32 = arith.constant dense<0.000000e+00> : vector<8xf32>
    %58 = vector.multi_reduction <add>, %55, %cst_32 [1] : vector<8x32xf32> to vector<8xf32>
    %59 = vector.shape_cast %58 : vector<8xf32> to vector<8x1xf32>
    %cst_33 = arith.constant 3.200000e+01 : f32
    %60 = vector.broadcast %cst_33 : f32 to vector<8x1xf32>
    %61 = arith.divf %59, %60 : vector<8x1xf32>
    %62 = vector.broadcast %61 : vector<8x1xf32> to vector<8x32xf32>
    %63 = arith.subf %55, %62 : vector<8x32xf32>
    %64 = arith.mulf %63, %63 : vector<8x32xf32>
    %cst_34 = arith.constant dense<0.000000e+00> : vector<8xf32>
    %65 = vector.multi_reduction <add>, %64, %cst_34 [1] : vector<8x32xf32> to vector<8xf32>
    %66 = vector.shape_cast %65 : vector<8xf32> to vector<8x1xf32>
    %cst_35 = arith.constant 3.200000e+01 : f32
    %67 = vector.broadcast %cst_35 : f32 to vector<8x1xf32>
    %68 = arith.divf %66, %67 : vector<8x1xf32>
    %cst_36 = arith.constant 9.99999974E-6 : f32
    %69 = vector.broadcast %cst_36 : f32 to vector<8x1xf32>
    %70 = arith.addf %68, %69 : vector<8x1xf32>
    %71 = math.rsqrt %70 : vector<8x1xf32>
    %72 = vector.broadcast %71 : vector<8x1xf32> to vector<8x32xf32>
    %73 = arith.mulf %63, %72 : vector<8x32xf32>
    %74 = vector.broadcast %56 : vector<1x32xf32> to vector<8x32xf32>
    %75 = arith.mulf %73, %74 : vector<8x32xf32>
    %76 = vector.broadcast %57 : vector<1x32xf32> to vector<8x32xf32>
    %77 = arith.addf %75, %76 : vector<8x32xf32>
    %c0_37 = arith.constant 0 : index
    %c0_38 = arith.constant 0 : index
    %78 = vector.load %arg11[%c0_37, %c0_38] : memref<32x128xf32, #tpu.memory_space<vmem>>, vector<32x128xf32>
    %cst_39 = arith.constant dense<0.000000e+00> : vector<8x128xf32>
    %79 = tpu.matmul %77, %78, %cst_39 {dimension_numbers = #tpu.dot_dimension_numbers<[1], [0], [0], [1], [0, 0, 1, 1], [], []>} : vector<8x32xf32>, vector<32x128xf32>, vector<8x128xf32> -> vector<8x128xf32>
    %c0_40 = arith.constant 0 : index
    %c0_41 = arith.constant 0 : index
    %80 = vector.load %arg12[%c0_40, %c0_41] : memref<1x128xf32, #tpu.memory_space<vmem>>, vector<1x128xf32>
    %81 = vector.broadcast %80 : vector<1x128xf32> to vector<8x128xf32>
    %82 = arith.addf %79, %81 : vector<8x128xf32>
    %cst_42 = arith.constant 5.000000e-01 : f32
    %83 = vector.broadcast %cst_42 : f32 to vector<8x128xf32>
    %84 = arith.mulf %83, %82 : vector<8x128xf32>
    %cst_43 = arith.constant 0.707106769 : f32
    %85 = vector.broadcast %cst_43 : f32 to vector<8x128xf32>
    %86 = arith.mulf %82, %85 : vector<8x128xf32>
    %87 = math.absf %86 : vector<8x128xf32>
    %cst_44 = arith.constant 0.327591091 : f32
    %88 = vector.broadcast %cst_44 : f32 to vector<8x128xf32>
    %89 = arith.mulf %88, %87 : vector<8x128xf32>
    %cst_45 = arith.constant 1.000000e+00 : f32
    %90 = vector.broadcast %cst_45 : f32 to vector<8x128xf32>
    %91 = arith.addf %90, %89 : vector<8x128xf32>
    %92 = tpu.reciprocal %91 {approx = true} : vector<8x128xf32> -> vector<8x128xf32>
    %cst_46 = arith.constant 1.06140542 : f32
    %93 = vector.broadcast %cst_46 : f32 to vector<8x128xf32>
    %94 = arith.mulf %93, %92 : vector<8x128xf32>
    %cst_47 = arith.constant -1.45315206 : f32
    %95 = vector.broadcast %cst_47 : f32 to vector<8x128xf32>
    %96 = arith.addf %94, %95 : vector<8x128xf32>
    %97 = arith.mulf %96, %92 : vector<8x128xf32>
    %cst_48 = arith.constant 1.42141378 : f32
    %98 = vector.broadcast %cst_48 : f32 to vector<8x128xf32>
    %99 = arith.addf %97, %98 : vector<8x128xf32>
    %100 = arith.mulf %99, %92 : vector<8x128xf32>
    %cst_49 = arith.constant -0.284496725 : f32
    %101 = vector.broadcast %cst_49 : f32 to vector<8x128xf32>
    %102 = arith.addf %100, %101 : vector<8x128xf32>
    %103 = arith.mulf %102, %92 : vector<8x128xf32>
    %cst_50 = arith.constant 0.254829586 : f32
    %104 = vector.broadcast %cst_50 : f32 to vector<8x128xf32>
    %105 = arith.addf %103, %104 : vector<8x128xf32>
    %106 = arith.mulf %105, %92 : vector<8x128xf32>
    %cst_51 = arith.constant 0.000000e+00 : f32
    %107 = vector.broadcast %cst_51 : f32 to vector<8x128xf32>
    %108 = arith.subf %107, %87 : vector<8x128xf32>
    %109 = arith.mulf %108, %87 : vector<8x128xf32>
    %110 = math.exp %109 : vector<8x128xf32>
    %111 = arith.mulf %106, %110 : vector<8x128xf32>
    %cst_52 = arith.constant 1.000000e+00 : f32
    %112 = vector.broadcast %cst_52 : f32 to vector<8x128xf32>
    %113 = arith.subf %112, %111 : vector<8x128xf32>
    %cst_53 = arith.constant 0.000000e+00 : f32
    %114 = vector.broadcast %cst_53 : f32 to vector<8x128xf32>
    %115 = arith.cmpf oge, %86, %114 : vector<8x128xf32>
    %cst_54 = arith.constant 0.000000e+00 : f32
    %116 = vector.broadcast %cst_54 : f32 to vector<8x128xf32>
    %117 = arith.subf %116, %113 : vector<8x128xf32>
    %118 = arith.select %115, %113, %117 : vector<8x128xi1>, vector<8x128xf32>
    %cst_55 = arith.constant 1.000000e+00 : f32
    %119 = vector.broadcast %cst_55 : f32 to vector<8x128xf32>
    %120 = arith.addf %119, %118 : vector<8x128xf32>
    %121 = arith.mulf %84, %120 : vector<8x128xf32>
    %c0_56 = arith.constant 0 : index
    %c0_57 = arith.constant 0 : index
    %122 = vector.load %arg13[%c0_56, %c0_57] : memref<128x32xf32, #tpu.memory_space<vmem>>, vector<128x32xf32>
    %cst_58 = arith.constant dense<0.000000e+00> : vector<8x32xf32>
    %123 = tpu.matmul %121, %122, %cst_58 {dimension_numbers = #tpu.dot_dimension_numbers<[1], [0], [0], [1], [0, 0, 1, 1], [], []>} : vector<8x128xf32>, vector<128x32xf32>, vector<8x32xf32> -> vector<8x32xf32>
    %124 = arith.addf %55, %123 : vector<8x32xf32>
    %c0_59 = arith.constant 0 : index
    %c0_60 = arith.constant 0 : index
    %125 = vector.load %arg14[%c0_59, %c0_60] : memref<1x32xf32, #tpu.memory_space<vmem>>, vector<1x32xf32>
    %126 = vector.broadcast %125 : vector<1x32xf32> to vector<8x32xf32>
    %127 = arith.addf %124, %126 : vector<8x32xf32>
    %c0_61 = arith.constant 0 : index
    %c0_62 = arith.constant 0 : index
    %c0_63 = arith.constant 0 : index
    %128 = vector.load %arg15[%c0_61, %c0_62, %c0_63] : memref<1x8x32xf32, #tpu.memory_space<vmem>>, vector<1x8x32xf32>
    %129 = vector.shape_cast %128 : vector<1x8x32xf32> to vector<8x32xf32>
    %130 = vector.shape_cast %127 : vector<8x32xf32> to vector<1x8x32xf32>
    tpu.vector_store %arg15[%c0_61, %c0_62, %c0_63], %130 {strides = array<i32>} : memref<1x8x32xf32, #tpu.memory_space<vmem>>, vector<1x8x32xf32>,
    return
  }
  func.func @transform_0(%arg0: i32) -> (i32, i32, i32) {
    %c0_i32 = arith.constant 0 : i32
    %c0_i32_0 = arith.constant 0 : i32
    %c0_i32_1 = arith.constant 0 : i32
    return %arg0, %c0_i32, %c0_i32_0 : i32, i32, i32
  }
  func.func @transform_1(%arg0: i32) -> (i32, i32) {
    %c0_i32 = arith.constant 0 : i32
    %c0_i32_0 = arith.constant 0 : i32
    %c0_i32_1 = arith.constant 0 : i32
    return %c0_i32, %c0_i32_0 : i32, i32
  }
  func.func @transform_2(%arg0: i32) -> (i32, i32) {
    %c0_i32 = arith.constant 0 : i32
    %c0_i32_0 = arith.constant 0 : i32
    %c0_i32_1 = arith.constant 0 : i32
    return %c0_i32, %c0_i32_0 : i32, i32
  }
  func.func @transform_3(%arg0: i32) -> (i32, i32) {
    %c0_i32 = arith.constant 0 : i32
    %c0_i32_0 = arith.constant 0 : i32
    %c0_i32_1 = arith.constant 0 : i32
    return %c0_i32, %c0_i32_0 : i32, i32
  }
  func.func @transform_4(%arg0: i32) -> (i32, i32) {
    %c0_i32 = arith.constant 0 : i32
    %c0_i32_0 = arith.constant 0 : i32
    %c0_i32_1 = arith.constant 0 : i32
    return %c0_i32, %c0_i32_0 : i32, i32
  }
  func.func @transform_5(%arg0: i32) -> (i32, i32) {
    %c0_i32 = arith.constant 0 : i32
    %c0_i32_0 = arith.constant 0 : i32
    %c0_i32_1 = arith.constant 0 : i32
    return %c0_i32, %c0_i32_0 : i32, i32
  }
  func.func @transform_6(%arg0: i32) -> (i32, i32) {
    %c0_i32 = arith.constant 0 : i32
    %c0_i32_0 = arith.constant 0 : i32
    %c0_i32_1 = arith.constant 0 : i32
    return %c0_i32, %c0_i32_0 : i32, i32
  }
  func.func @transform_7(%arg0: i32) -> (i32, i32) {
    %c0_i32 = arith.constant 0 : i32
    %c0_i32_0 = arith.constant 0 : i32
    %c0_i32_1 = arith.constant 0 : i32
    return %c0_i32, %c0_i32_0 : i32, i32
  }
  func.func @transform_8(%arg0: i32) -> (i32, i32) {
    %c0_i32 = arith.constant 0 : i32
    %c0_i32_0 = arith.constant 0 : i32
    %c0_i32_1 = arith.constant 0 : i32
    return %c0_i32, %c0_i32_0 : i32, i32
  }
  func.func @transform_9(%arg0: i32) -> (i32, i32) {
    %c0_i32 = arith.constant 0 : i32
    %c0_i32_0 = arith.constant 0 : i32
    %c0_i32_1 = arith.constant 0 : i32
    return %c0_i32, %c0_i32_0 : i32, i32
  }
  func.func @transform_10(%arg0: i32) -> (i32, i32) {
    %c0_i32 = arith.constant 0 : i32
    %c0_i32_0 = arith.constant 0 : i32
    %c0_i32_1 = arith.constant 0 : i32
    return %c0_i32, %c0_i32_0 : i32, i32
  }
  func.func @transform_11(%arg0: i32) -> (i32, i32) {
    %c0_i32 = arith.constant 0 : i32
    %c0_i32_0 = arith.constant 0 : i32
    %c0_i32_1 = arith.constant 0 : i32
    return %c0_i32, %c0_i32_0 : i32, i32
  }
  func.func @transform_12(%arg0: i32) -> (i32, i32) {
    %c0_i32 = arith.constant 0 : i32
    %c0_i32_0 = arith.constant 0 : i32
    %c0_i32_1 = arith.constant 0 : i32
    return %c0_i32, %c0_i32_0 : i32, i32
  }
  func.func @transform_13(%arg0: i32) -> (i32, i32) {
    %c0_i32 = arith.constant 0 : i32
    %c0_i32_0 = arith.constant 0 : i32
    %c0_i32_1 = arith.constant 0 : i32
    return %c0_i32, %c0_i32_0 : i32, i32
  }
  func.func @transform_14(%arg0: i32) -> (i32, i32, i32) {
    %c0_i32 = arith.constant 0 : i32
    %c0_i32_0 = arith.constant 0 : i32
    %c0_i32_1 = arith.constant 0 : i32
    return %arg0, %c0_i32, %c0_i32_0 : i32, i32, i32
  }
}

</mosaic_0001>

<llo_original>
// kernel: tpu_custom_call.1
$region0: #{tpu_custom_call.1}
  #allocation0 [shape = 'u32[]', space=smem, size = 0x4, offset = 0x4, fixed_abs, tag = 'smem constant byte address 0x4 - core index']
  #allocation1 [shape = 'u32[144,128]{1,0:T(1,128)}', space=vmem, size = 0x12000, scoped, tag = 'internal scratch']
  %s0 = inlined_call_operand.hbm [shape: f32[2,8,32], index: 0, kind: input, shape index: {}]
  %s1 = inlined_call_operand.vmem [shape: f32[1,32], index: 1, kind: input, shape index: {}]
  %s2 = inlined_call_operand.vmem [shape: f32[1,32], index: 2, kind: input, shape index: {}]
  %s3 = inlined_call_operand.vmem [shape: f32[32,32], index: 3, kind: input, shape index: {}]
  %s4 = inlined_call_operand.vmem [shape: f32[32,32], index: 4, kind: input, shape index: {}]
  %s5 = inlined_call_operand.vmem [shape: f32[32,32], index: 5, kind: input, shape index: {}]
  %s6 = inlined_call_operand.vmem [shape: f32[32,32], index: 6, kind: input, shape index: {}]
  %s7 = inlined_call_operand.vmem [shape: f32[1,32], index: 7, kind: input, shape index: {}]
  %s8 = inlined_call_operand.vmem [shape: f32[1,32], index: 8, kind: input, shape index: {}]
  %s9 = inlined_call_operand.vmem [shape: f32[1,32], index: 9, kind: input, shape index: {}]
  %s10 = inlined_call_operand.vmem [shape: f32[32,128], index: 10, kind: input, shape index: {}]
  %s11 = inlined_call_operand.vmem [shape: f32[1,128], index: 11, kind: input, shape index: {}]
  %s12 = inlined_call_operand.vmem [shape: f32[128,32], index: 12, kind: input, shape index: {}]
  %s13 = inlined_call_operand.vmem [shape: f32[1,32], index: 13, kind: input, shape index: {}]
  %s14 = inlined_call_operand.hbm [shape: f32[2,8,32], index: 14, kind: output, shape index: {}]
  %s15 = sld [smem:[#allocation0]]
  $region93: #{tpu_custom_call.1} parent=0
    _
  %s17 = ssub.s32 1, %s15
  %s18 = scalar_select 0, %s17, %s15
  $region1: #{tpu_custom_call.1} parent=0
    #allocation2 [shape = 'u8[8192]{0}', space=vmem, size = 0x2000, scoped, tag = 'input window, operand 0']
    #allocation3 [shape = 's32[2]{0}', space=sflag, size = 0x8, scoped, tag = 'scoped memory for tpu_custom_call.1']
    #allocation4 [shape = 's32[2]{0}', space=sflag, size = 0x8, scoped, tag = 'scoped memory for tpu_custom_call.1']
    #allocation5 [shape = 'u8[8192]{0}', space=vmem, size = 0x2000, scoped, tag = 'output window, operand 0']
    %19 = vsyncpa [#allocation3], 0
    %s20 = scalar_lea.sflag [#allocation3], 1
    %21 = vsyncpa %s20, 0
    %22 = vsyncpa [#allocation4], 0
    %s23 = scalar_lea.sflag [#allocation4], 1
    %24 = vsyncpa %s23, 0
    loop: start=0, step=1, limit=4
    $region2: #{tpu_custom_call.1} parent=1 // loop_pre_header
      _
    $region3: #{tpu_custom_call.1} parent=1 // loop_header
      %s26 = sphi 0, %s30
      %p27 = scmp.ge.s32.totalorder %s26, 4
      %s36 = sphi 0, %s38
      %s39 = sphi 0, %s36
      %s40 = sphi 0, %s39
      %s56 = sphi 0, %s40
      %s60 = sphi 0, %s60
      %s62 = sphi 0, %s60
      %s63 = sphi 0, %s62
      %s77 = sphi 0, %s63
      %s81 = sphi 0, %s81
      %s83 = sphi 0, %s81
      %s84 = sphi 0, %s83
      %s98 = sphi 0, %s84
      %s102 = sphi 0, %s102
      %s104 = sphi 0, %s102
      %s105 = sphi 0, %s104
      %s119 = sphi 0, %s105
      %s123 = sphi 0, %s123
      %s125 = sphi 0, %s123
      %s126 = sphi 0, %s125
      %s140 = sphi 0, %s126
      %s144 = sphi 0, %s144
      %s146 = sphi 0, %s144
      %s147 = sphi 0, %s146
      %s161 = sphi 0, %s147
      %s165 = sphi 0, %s165
      %s167 = sphi 0, %s165
      %s168 = sphi 0, %s167
      %s182 = sphi 0, %s168
      %s186 = sphi 0, %s186
      %s188 = sphi 0, %s186
      %s189 = sphi 0, %s188
      %s203 = sphi 0, %s189
      %s207 = sphi 0, %s207
      %s209 = sphi 0, %s207
      %s210 = sphi 0, %s209
      %s224 = sphi 0, %s210
      %s228 = sphi 0, %s228
      %s230 = sphi 0, %s228
      %s231 = sphi 0, %s230
      %s245 = sphi 0, %s231
      %s249 = sphi 0, %s249
      %s251 = sphi 0, %s249
      %s252 = sphi 0, %s251
      %s266 = sphi 0, %s252
      %s270 = sphi 0, %s270
      %s272 = sphi 0, %s270
      %s273 = sphi 0, %s272
      %s287 = sphi 0, %s273
      %s291 = sphi 0, %s291
      %s293 = sphi 0, %s291
      %s294 = sphi 0, %s293
      %s308 = sphi 0, %s294
      %s312 = sphi 0, %s312
      %s314 = sphi 0, %s312
      %s315 = sphi 0, %s314
      %s329 = sphi 0, %s315
      %s335 = sphi 0, %s337
      %s338 = sphi 0, %s335
      %s339 = sphi 0, %s338
      %s355 = sphi 0, %s339
    $region4: #{tpu_custom_call.1} parent=1 // loop_header_branch
      %29 = sbr.rel (%p27) target = $region8
    $region5: #{tpu_custom_call.1} parent=1 // loop_body
      %s31 = ssub.s32 %s26, 1
      %s32 = ssub.s32 %s26, 2
      %s33 = sadd.s32 %s26, 1
      %s34 = ssub.s32 %s26, %s33
      %p35 = scmp.eq.s32.totalorder %s34, 0
      %s37 = sadd.s32 %s36, 1
      %s38 = scalar_select %p35, %s36, %s37
      %p41 = pneg %p35
      %p42 = scmp.eq.s32.totalorder %s26, 1
      %p43 = por %p41, %p42
      %p44 = scmp.ne.s32.totalorder %s36, %s39
      %p45 = scmp.eq.s32.totalorder %s26, 0
      %p46 = por %p44, %p45
      %p47 = scmp.ne.s32.totalorder %s36, %s39
      %p48 = scmp.eq.s32.totalorder %s31, 1
      %p49 = por %p47, %p48
      %p50 = scmp.ne.s32.totalorder %s39, %s40
      %p51 = scmp.eq.s32.totalorder %s31, 0
      %p52 = por %p50, %p51
      %p53 = scmp.ne.s32.totalorder %s39, %s40
      %p54 = scmp.eq.s32.totalorder %s32, 1
      %p55 = por %p53, %p54
      %p57 = scmp.ne.s32.totalorder %s40, %s56
      %p58 = scmp.eq.s32.totalorder %s32, 0
      %p59 = por %p57, %p58
      %s61 = sadd.s32 %s60, 1
      %p64 = scmp.eq.s32.totalorder %s26, 1
      %p65 = scmp.ne.s32.totalorder %s60, %s62
      %p66 = scmp.eq.s32.totalorder %s26, 0
      %p67 = por %p65, %p66
      %p68 = scmp.ne.s32.totalorder %s60, %s62
      %p69 = scmp.eq.s32.totalorder %s31, 1
      %p70 = por %p68, %p69
      %p71 = scmp.ne.s32.totalorder %s62, %s63
      %p72 = scmp.eq.s32.totalorder %s31, 0
      %p73 = por %p71, %p72
      %p74 = scmp.ne.s32.totalorder %s62, %s63
      %p75 = scmp.eq.s32.totalorder %s32, 1
      %p76 = por %p74, %p75
      %p78 = scmp.ne.s32.totalorder %s63, %s77
      %p79 = scmp.eq.s32.totalorder %s32, 0
      %p80 = por %p78, %p79
      %s82 = sadd.s32 %s81, 1
      %p85 = scmp.eq.s32.totalorder %s26, 1
      %p86 = scmp.ne.s32.totalorder %s81, %s83
      %p87 = scmp.eq.s32.totalorder %s26, 0
      %p88 = por %p86, %p87
      %p89 = scmp.ne.s32.totalorder %s81, %s83
      %p90 = scmp.eq.s32.totalorder %s31, 1
      %p91 = por %p89, %p90
      %p92 = scmp.ne.s32.totalorder %s83, %s84
      %p93 = scmp.eq.s32.totalorder %s31, 0
      %p94 = por %p92, %p93
      %p95 = scmp.ne.s32.totalorder %s83, %s84
      %p96 = scmp.eq.s32.totalorder %s32, 1
      %p97 = por %p95, %p96
      %p99 = scmp.ne.s32.totalorder %s84, %s98
      %p100 = scmp.eq.s32.totalorder %s32, 0
      %p101 = por %p99, %p100
      %s103 = sadd.s32 %s102, 1
      %p106 = scmp.eq.s32.totalorder %s26, 1
      %p107 = scmp.ne.s32.totalorder %s102, %s104
      %p108 = scmp.eq.s32.totalorder %s26, 0
      %p109 = por %p107, %p108
      %p110 = scmp.ne.s32.totalorder %s102, %s104
      %p111 = scmp.eq.s32.totalorder %s31, 1
      %p112 = por %p110, %p111
      %p113 = scmp.ne.s32.totalorder %s104, %s105
      %p114 = scmp.eq.s32.totalorder %s31, 0
      %p115 = por %p113, %p114
      %p116 = scmp.ne.s32.totalorder %s104, %s105
      %p117 = scmp.eq.s32.totalorder %s32, 1
      %p118 = por %p116, %p117
      %p120 = scmp.ne.s32.totalorder %s105, %s119
      %p121 = scmp.eq.s32.totalorder %s32, 0
      %p122 = por %p120, %p121
      %s124 = sadd.s32 %s123, 1
      %p127 = scmp.eq.s32.totalorder %s26, 1
      %p128 = scmp.ne.s32.totalorder %s123, %s125
      %p129 = scmp.eq.s32.totalorder %s26, 0
      %p130 = por %p128, %p129
      %p131 = scmp.ne.s32.totalorder %s123, %s125
      %p132 = scmp.eq.s32.totalorder %s31, 1
      %p133 = por %p131, %p132
      %p134 = scmp.ne.s32.totalorder %s125, %s126
      %p135 = scmp.eq.s32.totalorder %s31, 0
      %p136 = por %p134, %p135
      %p137 = scmp.ne.s32.totalorder %s125, %s126
      %p138 = scmp.eq.s32.totalorder %s32, 1
      %p139 = por %p137, %p138
      %p141 = scmp.ne.s32.totalorder %s126, %s140
      %p142 = scmp.eq.s32.totalorder %s32, 0
      %p143 = por %p141, %p142
      %s145 = sadd.s32 %s144, 1
      %p148 = scmp.eq.s32.totalorder %s26, 1
      %p149 = scmp.ne.s32.totalorder %s144, %s146
      %p150 = scmp.eq.s32.totalorder %s26, 0
      %p151 = por %p149, %p150
      %p152 = scmp.ne.s32.totalorder %s144, %s146
      %p153 = scmp.eq.s32.totalorder %s31, 1
      %p154 = por %p152, %p153
      %p155 = scmp.ne.s32.totalorder %s146, %s147
      %p156 = scmp.eq.s32.totalorder %s31, 0
      %p157 = por %p155, %p156
      %p158 = scmp.ne.s32.totalorder %s146, %s147
      %p159 = scmp.eq.s32.totalorder %s32, 1
      %p160 = por %p158, %p159
      %p162 = scmp.ne.s32.totalorder %s147, %s161
      %p163 = scmp.eq.s32.totalorder %s32, 0
      %p164 = por %p162, %p163
      %s166 = sadd.s32 %s165, 1
      %p169 = scmp.eq.s32.totalorder %s26, 1
      %p170 = scmp.ne.s32.totalorder %s165, %s167
      %p171 = scmp.eq.s32.totalorder %s26, 0
      %p172 = por %p170, %p171
      %p173 = scmp.ne.s32.totalorder %s165, %s167
      %p174 = scmp.eq.s32.totalorder %s31, 1
      %p175 = por %p173, %p174
      %p176 = scmp.ne.s32.totalorder %s167, %s168
      %p177 = scmp.eq.s32.totalorder %s31, 0
      %p178 = por %p176, %p177
      %p179 = scmp.ne.s32.totalorder %s167, %s168
      %p180 = scmp.eq.s32.totalorder %s32, 1
      %p181 = por %p179, %p180
      %p183 = scmp.ne.s32.totalorder %s168, %s182
      %p184 = scmp.eq.s32.totalorder %s32, 0
      %p185 = por %p183, %p184
      %s187 = sadd.s32 %s186, 1
      %p190 = scmp.eq.s32.totalorder %s26, 1
      %p191 = scmp.ne.s32.totalorder %s186, %s188
      %p192 = scmp.eq.s32.totalorder %s26, 0
      %p193 = por %p191, %p192
      %p194 = scmp.ne.s32.totalorder %s186, %s188
      %p195 = scmp.eq.s32.totalorder %s31, 1
      %p196 = por %p194, %p195
      %p197 = scmp.ne.s32.totalorder %s188, %s189
      %p198 = scmp.eq.s32.totalorder %s31, 0
      %p199 = por %p197, %p198
      %p200 = scmp.ne.s32.totalorder %s188, %s189
      %p201 = scmp.eq.s32.totalorder %s32, 1
      %p202 = por %p200, %p201
      %p204 = scmp.ne.s32.totalorder %s189, %s203
      %p205 = scmp.eq.s32.totalorder %s32, 0
      %p206 = por %p204, %p205
      %s208 = sadd.s32 %s207, 1
      %p211 = scmp.eq.s32.totalorder %s26, 1
      %p212 = scmp.ne.s32.totalorder %s207, %s209
      %p213 = scmp.eq.s32.totalorder %s26, 0
      %p214 = por %p212, %p213
      %p215 = scmp.ne.s32.totalorder %s207, %s209
      %p216 = scmp.eq.s32.totalorder %s31, 1
      %p217 = por %p215, %p216
      %p218 = scmp.ne.s32.totalorder %s209, %s210
      %p219 = scmp.eq.s32.totalorder %s31, 0
      %p220 = por %p218, %p219
      %p221 = scmp.ne.s32.totalorder %s209, %s210
      %p222 = scmp.eq.s32.totalorder %s32, 1
      %p223 = por %p221, %p222
      %p225 = scmp.ne.s32.totalorder %s210, %s224
      %p226 = scmp.eq.s32.totalorder %s32, 0
      %p227 = por %p225, %p226
      %s229 = sadd.s32 %s228, 1
      %p232 = scmp.eq.s32.totalorder %s26, 1
      %p233 = scmp.ne.s32.totalorder %s228, %s230
      %p234 = scmp.eq.s32.totalorder %s26, 0
      %p235 = por %p233, %p234
      %p236 = scmp.ne.s32.totalorder %s228, %s230
      %p237 = scmp.eq.s32.totalorder %s31, 1
      %p238 = por %p236, %p237
      %p239 = scmp.ne.s32.totalorder %s230, %s231
      %p240 = scmp.eq.s32.totalorder %s31, 0
      %p241 = por %p239, %p240
      %p242 = scmp.ne.s32.totalorder %s230, %s231
      %p243 = scmp.eq.s32.totalorder %s32, 1
      %p244 = por %p242, %p243
      %p246 = scmp.ne.s32.totalorder %s231, %s245
      %p247 = scmp.eq.s32.totalorder %s32, 0
      %p248 = por %p246, %p247
      %s250 = sadd.s32 %s249, 1
      %p253 = scmp.eq.s32.totalorder %s26, 1
      %p254 = scmp.ne.s32.totalorder %s249, %s251
      %p255 = scmp.eq.s32.totalorder %s26, 0
      %p256 = por %p254, %p255
      %p257 = scmp.ne.s32.totalorder %s249, %s251
      %p258 = scmp.eq.s32.totalorder %s31, 1
      %p259 = por %p257, %p258
      %p260 = scmp.ne.s32.totalorder %s251, %s252
      %p261 = scmp.eq.s32.totalorder %s31, 0
      %p262 = por %p260, %p261
      %p263 = scmp.ne.s32.totalorder %s251, %s252
      %p264 = scmp.eq.s32.totalorder %s32, 1
      %p265 = por %p263, %p264
      %p267 = scmp.ne.s32.totalorder %s252, %s266
      %p268 = scmp.eq.s32.totalorder %s32, 0
      %p269 = por %p267, %p268
      %s271 = sadd.s32 %s270, 1
      %p274 = scmp.eq.s32.totalorder %s26, 1
      %p275 = scmp.ne.s32.totalorder %s270, %s272
      %p276 = scmp.eq.s32.totalorder %s26, 0
      %p277 = por %p275, %p276
      %p278 = scmp.ne.s32.totalorder %s270, %s272
      %p279 = scmp.eq.s32.totalorder %s31, 1
      %p280 = por %p278, %p279
      %p281 = scmp.ne.s32.totalorder %s272, %s273
      %p282 = scmp.eq.s32.totalorder %s31, 0
      %p283 = por %p281, %p282
      %p284 = scmp.ne.s32.totalorder %s272, %s273
      %p285 = scmp.eq.s32.totalorder %s32, 1
      %p286 = por %p284, %p285
      %p288 = scmp.ne.s32.totalorder %s273, %s287
      %p289 = scmp.eq.s32.totalorder %s32, 0
      %p290 = por %p288, %p289
      %s292 = sadd.s32 %s291, 1
      %p295 = scmp.eq.s32.totalorder %s26, 1
      %p296 = scmp.ne.s32.totalorder %s291, %s293
      %p297 = scmp.eq.s32.totalorder %s26, 0
      %p298 = por %p296, %p297
      %p299 = scmp.ne.s32.totalorder %s291, %s293
      %p300 = scmp.eq.s32.totalorder %s31, 1
      %p301 = por %p299, %p300
      %p302 = scmp.ne.s32.totalorder %s293, %s294
      %p303 = scmp.eq.s32.totalorder %s31, 0
      %p304 = por %p302, %p303
      %p305 = scmp.ne.s32.totalorder %s293, %s294
      %p306 = scmp.eq.s32.totalorder %s32, 1
      %p307 = por %p305, %p306
      %p309 = scmp.ne.s32.totalorder %s294, %s308
      %p310 = scmp.eq.s32.totalorder %s32, 0
      %p311 = por %p309, %p310
      %s313 = sadd.s32 %s312, 1
      %p316 = scmp.eq.s32.totalorder %s26, 1
      %p317 = scmp.ne.s32.totalorder %s312, %s314
      %p318 = scmp.eq.s32.totalorder %s26, 0
      %p319 = por %p317, %p318
      %p320 = scmp.ne.s32.totalorder %s312, %s314
      %p321 = scmp.eq.s32.totalorder %s31, 1
      %p322 = por %p320, %p321
      %p323 = scmp.ne.s32.totalorder %s314, %s315
      %p324 = scmp.eq.s32.totalorder %s31, 0
      %p325 = por %p323, %p324
      %p326 = scmp.ne.s32.totalorder %s314, %s315
      %p327 = scmp.eq.s32.totalorder %s32, 1
      %p328 = por %p326, %p327
      %p330 = scmp.ne.s32.totalorder %s315, %s329
      %p331 = scmp.eq.s32.totalorder %s32, 0
      %p332 = por %p330, %p331
      %s333 = ssub.s32 %s26, %s33
      %p334 = scmp.eq.s32.totalorder %s333, 0
      %s336 = sadd.s32 %s335, 1
      %s337 = scalar_select %p334, %s335, %s336
      %p340 = pneg %p334
      %p341 = scmp.eq.s32.totalorder %s26, 1
      %p342 = por %p340, %p341
      %p343 = scmp.ne.s32.totalorder %s335, %s338
      %p344 = scmp.eq.s32.totalorder %s26, 0
      %p345 = por %p343, %p344
      %p346 = scmp.ne.s32.totalorder %s335, %s338
      %p347 = scmp.eq.s32.totalorder %s31, 1
      %p348 = por %p346, %p347
      %p349 = scmp.ne.s32.totalorder %s338, %s339
      %p350 = scmp.eq.s32.totalorder %s31, 0
      %p351 = por %p349, %p350
      %p352 = scmp.ne.s32.totalorder %s338, %s339
      %p353 = scmp.eq.s32.totalorder %s32, 1
      %p354 = por %p352, %p353
      %p356 = scmp.ne.s32.totalorder %s339, %s355
      %p357 = scmp.eq.s32.totalorder %s32, 0
      %p358 = por %p356, %p357
      %p359 = scmp.le.s32.totalorder 1, %s26
      %p360 = scmp.lt.s32.totalorder %s26, 3
      %p361 = pnand %p359, %p360
      %p362 = pneg %p361
      // Predicated region
      $region9: #{tpu_custom_call.1} parent=5 // pred_check
        _
      $region10: #{tpu_custom_call.1} parent=5 // pred_check_branch
        %364 = sbr.rel (%p361) target = $region12
      $region11: #{tpu_custom_call.1} parent=5 // pred_region
        %s365 = ssub.s32 %s26, 1
        // Predicated region
        $region13: #{tpu_custom_call.1} parent=11 // pred_check
          %p366 = pneg %p73
        $region14: #{tpu_custom_call.1} parent=11 // pred_check_branch
          %368 = sbr.rel (%p366) target = $region16
        $region15: #{tpu_custom_call.1} parent=11 // pred_region
          _
        $region16: #{tpu_custom_call.1} parent=11 // pred_fallthru
          _
        // Predicated region
        $region17: #{tpu_custom_call.1} parent=11 // pred_check
          %p369 = pneg %p94
        $region18: #{tpu_custom_call.1} parent=11 // pred_check_branch
          %371 = sbr.rel (%p369) target = $region20
        $region19: #{tpu_custom_call.1} parent=11 // pred_region
          _
        $region20: #{tpu_custom_call.1} parent=11 // pred_fallthru
          _
        // Predicated region
        $region21: #{tpu_custom_call.1} parent=11 // pred_check
          %p372 = pneg %p115
        $region22: #{tpu_custom_call.1} parent=11 // pred_check_branch
          %374 = sbr.rel (%p372) target = $region24
        $region23: #{tpu_custom_call.1} parent=11 // pred_region
          _
        $region24: #{tpu_custom_call.1} parent=11 // pred_fallthru
          _
        // Predicated region
        $region25: #{tpu_custom_call.1} parent=11 // pred_check
          %p375 = pneg %p136
        $region26: #{tpu_custom_call.1} parent=11 // pred_check_branch
          %377 = sbr.rel (%p375) target = $region28
        $region27: #{tpu_custom_call.1} parent=11 // pred_region
          _
        $region28: #{tpu_custom_call.1} parent=11 // pred_fallthru
          _
        // Predicated region
        $region29: #{tpu_custom_call.1} parent=11 // pred_check
          %p378 = pneg %p157
        $region30: #{tpu_custom_call.1} parent=11 // pred_check_branch
          %380 = sbr.rel (%p378) target = $region32
        $region31: #{tpu_custom_call.1} parent=11 // pred_region
          _
        $region32: #{tpu_custom_call.1} parent=11 // pred_fallthru
          _
        // Predicated region
        $region33: #{tpu_custom_call.1} parent=11 // pred_check
          %p381 = pneg %p178
        $region34: #{tpu_custom_call.1} parent=11 // pred_check_branch
          %383 = sbr.rel (%p381) target = $region36
        $region35: #{tpu_custom_call.1} parent=11 // pred_region
          _
        $region36: #{tpu_custom_call.1} parent=11 // pred_fallthru
          _
        // Predicated region
        $region37: #{tpu_custom_call.1} parent=11 // pred_check
          %p384 = pneg %p199
        $region38: #{tpu_custom_call.1} parent=11 // pred_check_branch
          %386 = sbr.rel (%p384) target = $region40
        $region39: #{tpu_custom_call.1} parent=11 // pred_region
          _
        $region40: #{tpu_custom_call.1} parent=11 // pred_fallthru
          _
        // Predicated region
        $region41: #{tpu_custom_call.1} parent=11 // pred_check
          %p387 = pneg %p220
        $region42: #{tpu_custom_call.1} parent=11 // pred_check_branch
          %389 = sbr.rel (%p387) target = $region44
        $region43: #{tpu_custom_call.1} parent=11 // pred_region
          _
        $region44: #{tpu_custom_call.1} parent=11 // pred_fallthru
          _
        // Predicated region
        $region45: #{tpu_custom_call.1} parent=11 // pred_check
          %p390 = pneg %p241
        $region46: #{tpu_custom_call.1} parent=11 // pred_check_branch
          %392 = sbr.rel (%p390) target = $region48
        $region47: #{tpu_custom_call.1} parent=11 // pred_region
          _
        $region48: #{tpu_custom_call.1} parent=11 // pred_fallthru
          _
        // Predicated region
        $region49: #{tpu_custom_call.1} parent=11 // pred_check
          %p393 = pneg %p262
        $region50: #{tpu_custom_call.1} parent=11 // pred_check_branch
          %395 = sbr.rel (%p393) target = $region52
        $region51: #{tpu_custom_call.1} parent=11 // pred_region
          _
        $region52: #{tpu_custom_call.1} parent=11 // pred_fallthru
          _
        // Predicated region
        $region53: #{tpu_custom_call.1} parent=11 // pred_check
          %p396 = pneg %p283
        $region54: #{tpu_custom_call.1} parent=11 // pred_check_branch
          %398 = sbr.rel (%p396) target = $region56
        $region55: #{tpu_custom_call.1} parent=11 // pred_region
          _
        $region56: #{tpu_custom_call.1} parent=11 // pred_fallthru
          _
        // Predicated region
        $region57: #{tpu_custom_call.1} parent=11 // pred_check
          %p399 = pneg %p304
        $region58: #{tpu_custom_call.1} parent=11 // pred_check_branch
          %401 = sbr.rel (%p399) target = $region60
        $region59: #{tpu_custom_call.1} parent=11 // pred_region
          _
        $region60: #{tpu_custom_call.1} parent=11 // pred_fallthru
          _
        // Predicated region
        $region61: #{tpu_custom_call.1} parent=11 // pred_check
          %p402 = pneg %p325
        $region62: #{tpu_custom_call.1} parent=11 // pred_check_branch
          %404 = sbr.rel (%p402) target = $region64
        $region63: #{tpu_custom_call.1} parent=11 // pred_region
          _
        $region64: #{tpu_custom_call.1} parent=11 // pred_fallthru
          _
      $region12: #{tpu_custom_call.1} parent=5 // pred_fallthru
        _
      %p405 = scmp.lt.s32.totalorder %s26, 2
      // Predicated region
      $region65: #{tpu_custom_call.1} parent=5 // pred_check
        %p406 = pneg %p405
      $region66: #{tpu_custom_call.1} parent=5 // pred_check_branch
        %408 = sbr.rel (%p406) target = $region68
      $region67: #{tpu_custom_call.1} parent=5 // pred_region
        // Predicated region
        $region69: #{tpu_custom_call.1} parent=67 // pred_check
          %p409 = pneg %p46
        $region70: #{tpu_custom_call.1} parent=67 // pred_check_branch
          %411 = sbr.rel (%p409) target = $region72
        $region71: #{tpu_custom_call.1} parent=67 // pred_region
          %s412 = sand.u32 %s36, 1
          %s413 = scalar_lea.sflag [#allocation3], %s412
          %s414 = sand.u32 %s36, 1
          %s415 = smul.addr %s414, 8
          %s416 = scalar_lea.vmem [#allocation2], %s415
          %s418 = ssub.s32 128, 128
          %419 = vsyncadd %s413, %s418
          %s420 = smul.addr %s26, 128
          %s421 = scalar_lea.hbm %s0, %s420
          %s423 = sshll.u32 %s416, 4
          %s424 = int_to_ptr.vmem [resolvable:$true] %s423
          %426 = dma.hbm_to_vmem [thread:$0]  %s421, 128, %s424, %s413
        $region72: #{tpu_custom_call.1} parent=67 // pred_fallthru
          _
      $region68: #{tpu_custom_call.1} parent=5 // pred_fallthru
        _
      %p427 = scmp.le.s32.totalorder 1, %s26
      %p428 = scmp.lt.s32.totalorder %s26, 3
      %p429 = pnand %p427, %p428
      %p430 = pneg %p429
      // Predicated region
      $region73: #{tpu_custom_call.1} parent=5 // pred_check
        _
      $region74: #{tpu_custom_call.1} parent=5 // pred_check_branch
        %432 = sbr.rel (%p429) target = $region76
      $region75: #{tpu_custom_call.1} parent=5 // pred_region
        %s433 = ssub.s32 %s26, 1
        %s434 = sand.u32 %s39, 1
        %s435 = scalar_lea.sflag [#allocation3], %s434
        %s436 = sand.u32 %s39, 1
        %s437 = smul.addr %s436, 8
        %s438 = scalar_lea.vmem [#allocation2], %s437
        // Predicated region
        $region77: #{tpu_custom_call.1} parent=75 // pred_check
          %p439 = pneg %p52
        $region78: #{tpu_custom_call.1} parent=75 // pred_check_branch
          %441 = sbr.rel (%p439) target = $region80
        $region79: #{tpu_custom_call.1} parent=75 // pred_region
          %442 = dma.done %s435, 128
        $region80: #{tpu_custom_call.1} parent=75 // pred_fallthru
          _
        %s443 = sand.u32 %s39, 1
        %s444 = scalar_lea.sflag [#allocation3], %s443
        %s445 = sand.u32 %s39, 1
        %s446 = smul.addr %s445, 8
        %s447 = scalar_lea.vmem [#allocation2], %s446
        %p448 = pneg %p52
        %p449 = pneg %p49
        %p450 = pneg %p73
        %p451 = pneg %p70
        %p452 = pneg %p94
        %p453 = pneg %p91
        %p454 = pneg %p115
        %p455 = pneg %p112
        %p456 = pneg %p136
        %p457 = pneg %p133
        %p458 = pneg %p157
        %p459 = pneg %p154
        %p460 = pneg %p178
        %p461 = pneg %p175
        %p462 = pneg %p199
        %p463 = pneg %p196
        %p464 = pneg %p220
        %p465 = pneg %p217
        %p466 = pneg %p241
        %p467 = pneg %p238
        %p468 = pneg %p262
        %p469 = pneg %p259
        %p470 = pneg %p283
        %p471 = pneg %p280
        %p472 = pneg %p304
        %p473 = pneg %p301
        %p474 = pneg %p325
        %p475 = pneg %p322
        %p476 = pneg %p351
        %p477 = pneg %p348
        %s478 = sand.u32 %s338, 1
        %s479 = scalar_lea.sflag [#allocation4], %s478
        %s480 = sand.u32 %s338, 1
        %s481 = smul.addr %s480, 8
        %s482 = scalar_lea.vmem [#allocation5], %s481
        %v483 = vld [vmem:[%s438] sm:$0xff]
        %v484 = vld [vmem:[%s1] sm:$0x1]
        %v485 = vld [vmem:[%s2] sm:$0x1]
        %vm486 = vcmask 261120
        %v487 = vsel %vm486, %v483, 0.0
        %488 = vadd.xlane.f32.xlu0 %v487
        %v489 = vpop.xlane.xlu0 %488
        %v490 = vrcp.pop 32.0
        %v491 = vmul.f32 %v489, %v490
        %v492 = vsub.f32 %v483, %v491
        %v493 = vmul.f32 %v492, %v492
        %v494 = vsel %vm486, %v493, 0.0
        %495 = vadd.xlane.f32.xlu0 %v494
        %v496 = vpop.xlane.xlu0 %495
        %v497 = vmul.f32 %v496, %v490
        %v498 = vadd.f32 %v497, 1e-05
        %v499 = vrsqrt.pop %v498
        %v500 = vmul.f32 %v492, %v499
        %v502 = vlaneseq
        %v503 = vshrl.u32 %v502, 7
        %v504 = vsub.s32 0, %v503
        %v505 = vrot.slane %v484, %v504
        %v507 = vmul.f32 %v500, %v505
        %v509 = vlaneseq
        %v510 = vshrl.u32 %v509, 7
        %v511 = vsub.s32 0, %v510
        %v512 = vrot.slane %v485, %v511
        %v514 = vadd.f32 %v507, %v512
        %v515 = vld [vmem:[%s3] sm:$0xff]
        %v516 = vld [vmem:[%s3 + $0x8] sm:$0xff]
        %v517 = vld [vmem:[%s3 + $0x10] sm:$0xff]
        %v518 = vld [vmem:[%s3 + $0x18] sm:$0xff]
        %v520 = vsel %vm486, %v514, 0
        %522 = vmatprep.subr.mxu0 0.0
        %523 = vmatpush1.msra.mxu0 %v515
        %524 = vmatprep.subr.mxu0 0.0
        %525 = vmatpush1.msra.mxu0 %v516
        %526 = vmatprep.subr.mxu0 0.0
        %527 = vmatpush1.msra.mxu0 %v517
        %528 = vmatprep.subr.mxu0 0.0
        %529 = vmatpush1.msra.mxu0 %v518
        %530 = vmatprep.subr.mxu0 0.0
        %531 = vmatpush1.msra.mxu0 0.0
        %532 = vmatprep.subr.mxu0 0.0
        %533 = vmatpush1.msra.mxu0 0.0
        %534 = vmatprep.subr.mxu0 0.0
        %535 = vmatpush1.msra.mxu0 0.0
        %536 = vmatprep.subr.mxu0 0.0
        %537 = vmatpush1.msra.mxu0 0.0
        %538 = vmatprep.subr.mxu0 0.0
        %539 = vmatpush1.msra.mxu0 0.0
        %540 = vmatprep.subr.mxu0 0.0
        %541 = vmatpush1.msra.mxu0 0.0
        %542 = vmatprep.subr.mxu0 0.0
        %543 = vmatpush1.msra.mxu0 0.0
        %544 = vmatprep.subr.mxu0 0.0
        %545 = vmatpush1.msra.mxu0 0.0
        %546 = vmatprep.subr.mxu0 0.0
        %547 = vmatpush1.msra.mxu0 0.0
        %548 = vmatprep.subr.mxu0 0.0
        %549 = vmatpush1.msra.mxu0 0.0
        %550 = vmatprep.subr.mxu0 0.0
        %551 = vmatpush1.msra.mxu0 0.0
        %552 = vmatprep.subr.mxu0 0.0
        %553 = vmatpush1.msra.mxu0 0.0
        %554 = vmatprep.subr.mxu0 0.0
        %555 = vmatpush1.msra.mxu0 0.0
        %556 = vmatprep.subr.mxu0 0.0
        %557 = vmatpush1.msra.mxu0 0.0
        %558 = vmatprep.subr.mxu0 0.0
        %559 = vmatpush1.msra.mxu0 0.0
        %560 = vmatprep.subr.mxu0 0.0
        %561 = vmatpush1.msra.mxu0 0.0
        %562 = vmatprep.subr.mxu0 0.0
        %563 = vmatpush1.msra.mxu0 0.0
        %564 = vmatprep.subr.mxu0 0.0
        %565 = vmatpush1.msra.mxu0 0.0
        %566 = vmatprep.subr.mxu0 0.0
        %567 = vmatpush1.msra.mxu0 0.0
        %568 = vmatprep.subr.mxu0 0.0
        %569 = vmatpush1.msra.mxu0 0.0
        %570 = vmatprep.subr.mxu0 0.0
        %571 = vmatpush1.msra.mxu0 0.0
        %572 = vmatprep.subr.mxu0 0.0
        %573 = vmatpush1.msra.mxu0 0.0
        %574 = vmatprep.subr.mxu0 0.0
        %575 = vmatpush1.msra.mxu0 0.0
        %576 = vmatprep.subr.mxu0 0.0
        %577 = vmatpush1.msra.mxu0 0.0
        %578 = vmatprep.subr.mxu0 0.0
        %579 = vmatpush1.msra.mxu0 0.0
        %580 = vmatprep.subr.mxu0 0.0
        %581 = vmatpush1.msra.mxu0 0.0
        %582 = vmatprep.subr.mxu0 0.0
        %583 = vmatpush1.msra.mxu0 0.0
        %584 = vmatprep.subr.mxu0 0.0
        %585 = vmatpush1.msra.mxu0 0.0
        %586 = vmatprep.mubr.f32.mxu0 0.0
        %587 = vmatmul.mubr.f32.gmra.mrb[0].mxu0 %v520
        %v588 = vpop.f32.mrb[0].mxu0
        %v589 = vadd.f32 0.0, %v588
        %v590 = vpop.f32.mrb[0].mxu0
        %591 = vdwg.mxu0
        %v592 = vld [vmem:[%s4] sm:$0xff]
        %v593 = vld [vmem:[%s4 + $0x8] sm:$0xff]
        %v594 = vld [vmem:[%s4 + $0x10] sm:$0xff]
        %v595 = vld [vmem:[%s4 + $0x18] sm:$0xff]
        %596 = vmatprep.subr.mxu0 0.0
        %597 = vmatpush1.msra.mxu0 %v592
        %598 = vmatprep.subr.mxu0 0.0
        %599 = vmatpush1.msra.mxu0 %v593
        %600 = vmatprep.subr.mxu0 0.0
        %601 = vmatpush1.msra.mxu0 %v594
        %602 = vmatprep.subr.mxu0 0.0
        %603 = vmatpush1.msra.mxu0 %v595
        %604 = vmatprep.subr.mxu0 0.0
        %605 = vmatpush1.msra.mxu0 0.0
        %606 = vmatprep.subr.mxu0 0.0
        %607 = vmatpush1.msra.mxu0 0.0
        %608 = vmatprep.subr.mxu0 0.0
        %609 = vmatpush1.msra.mxu0 0.0
        %610 = vmatprep.subr.mxu0 0.0
        %611 = vmatpush1.msra.mxu0 0.0
        %612 = vmatprep.subr.mxu0 0.0
        %613 = vmatpush1.msra.mxu0 0.0
        %614 = vmatprep.subr.mxu0 0.0
        %615 = vmatpush1.msra.mxu0 0.0
        %616 = vmatprep.subr.mxu0 0.0
        %617 = vmatpush1.msra.mxu0 0.0
        %618 = vmatprep.subr.mxu0 0.0
        %619 = vmatpush1.msra.mxu0 0.0
        %620 = vmatprep.subr.mxu0 0.0
        %621 = vmatpush1.msra.mxu0 0.0
        %622 = vmatprep.subr.mxu0 0.0
        %623 = vmatpush1.msra.mxu0 0.0
        %624 = vmatprep.subr.mxu0 0.0
        %625 = vmatpush1.msra.mxu0 0.0
        %626 = vmatprep.subr.mxu0 0.0
        %627 = vmatpush1.msra.mxu0 0.0
        %628 = vmatprep.subr.mxu0 0.0
        %629 = vmatpush1.msra.mxu0 0.0
        %630 = vmatprep.subr.mxu0 0.0
        %631 = vmatpush1.msra.mxu0 0.0
        %632 = vmatprep.subr.mxu0 0.0
        %633 = vmatpush1.msra.mxu0 0.0
        %634 = vmatprep.subr.mxu0 0.0
        %635 = vmatpush1.msra.mxu0 0.0
        %636 = vmatprep.subr.mxu0 0.0
        %637 = vmatpush1.msra.mxu0 0.0
        %638 = vmatprep.subr.mxu0 0.0
        %639 = vmatpush1.msra.mxu0 0.0
        %640 = vmatprep.subr.mxu0 0.0
        %641 = vmatpush1.msra.mxu0 0.0
        %642 = vmatprep.subr.mxu0 0.0
        %643 = vmatpush1.msra.mxu0 0.0
        %644 = vmatprep.subr.mxu0 0.0
        %645 = vmatpush1.msra.mxu0 0.0
        %646 = vmatprep.subr.mxu0 0.0
        %647 = vmatpush1.msra.mxu0 0.0
        %648 = vmatprep.subr.mxu0 0.0
        %649 = vmatpush1.msra.mxu0 0.0
        %650 = vmatprep.subr.mxu0 0.0
        %651 = vmatpush1.msra.mxu0 0.0
        %652 = vmatprep.subr.mxu0 0.0
        %653 = vmatpush1.msra.mxu0 0.0
        %654 = vmatprep.subr.mxu0 0.0
        %655 = vmatpush1.msra.mxu0 0.0
        %656 = vmatprep.subr.mxu0 0.0
        %657 = vmatpush1.msra.mxu0 0.0
        %658 = vmatprep.subr.mxu0 0.0
        %659 = vmatpush1.msra.mxu0 0.0
        %660 = vmatprep.mubr.f32.mxu0 0.0
        %661 = vmatmul.mubr.f32.gmra.mrb[0].mxu0 %v520
        %v662 = vpop.f32.mrb[0].mxu0
        %v663 = vadd.f32 0.0, %v662
        %v664 = vpop.f32.mrb[0].mxu0
        %665 = vdwg.mxu0
        %v666 = vld [vmem:[%s5] sm:$0xff]
        %v667 = vld [vmem:[%s5 + $0x8] sm:$0xff]
        %v668 = vld [vmem:[%s5 + $0x10] sm:$0xff]
        %v669 = vld [vmem:[%s5 + $0x18] sm:$0xff]
        %670 = vmatprep.subr.mxu0 0.0
        %671 = vmatpush1.msra.mxu0 %v666
        %672 = vmatprep.subr.mxu0 0.0
        %673 = vmatpush1.msra.mxu0 %v667
        %674 = vmatprep.subr.mxu0 0.0
        %675 = vmatpush1.msra.mxu0 %v668
        %676 = vmatprep.subr.mxu0 0.0
        %677 = vmatpush1.msra.mxu0 %v669
        %678 = vmatprep.subr.mxu0 0.0
        %679 = vmatpush1.msra.mxu0 0.0
        %680 = vmatprep.subr.mxu0 0.0
        %681 = vmatpush1.msra.mxu0 0.0
        %682 = vmatprep.subr.mxu0 0.0
        %683 = vmatpush1.msra.mxu0 0.0
        %684 = vmatprep.subr.mxu0 0.0
        %685 = vmatpush1.msra.mxu0 0.0
        %686 = vmatprep.subr.mxu0 0.0
        %687 = vmatpush1.msra.mxu0 0.0
        %688 = vmatprep.subr.mxu0 0.0
        %689 = vmatpush1.msra.mxu0 0.0
        %690 = vmatprep.subr.mxu0 0.0
        %691 = vmatpush1.msra.mxu0 0.0
        %692 = vmatprep.subr.mxu0 0.0
        %693 = vmatpush1.msra.mxu0 0.0
        %694 = vmatprep.subr.mxu0 0.0
        %695 = vmatpush1.msra.mxu0 0.0
        %696 = vmatprep.subr.mxu0 0.0
        %697 = vmatpush1.msra.mxu0 0.0
        %698 = vmatprep.subr.mxu0 0.0
        %699 = vmatpush1.msra.mxu0 0.0
        %700 = vmatprep.subr.mxu0 0.0
        %701 = vmatpush1.msra.mxu0 0.0
        %702 = vmatprep.subr.mxu0 0.0
        %703 = vmatpush1.msra.mxu0 0.0
        %704 = vmatprep.subr.mxu0 0.0
        %705 = vmatpush1.msra.mxu0 0.0
        %706 = vmatprep.subr.mxu0 0.0
        %707 = vmatpush1.msra.mxu0 0.0
        %708 = vmatprep.subr.mxu0 0.0
        %709 = vmatpush1.msra.mxu0 0.0
        %710 = vmatprep.subr.mxu0 0.0
        %711 = vmatpush1.msra.mxu0 0.0
        %712 = vmatprep.subr.mxu0 0.0
        %713 = vmatpush1.msra.mxu0 0.0
        %714 = vmatprep.subr.mxu0 0.0
        %715 = vmatpush1.msra.mxu0 0.0
        %716 = vmatprep.subr.mxu0 0.0
        %717 = vmatpush1.msra.mxu0 0.0
        %718 = vmatprep.subr.mxu0 0.0
        %719 = vmatpush1.msra.mxu0 0.0
        %720 = vmatprep.subr.mxu0 0.0
        %721 = vmatpush1.msra.mxu0 0.0
        %722 = vmatprep.subr.mxu0 0.0
        %723 = vmatpush1.msra.mxu0 0.0
        %724 = vmatprep.subr.mxu0 0.0
        %725 = vmatpush1.msra.mxu0 0.0
        %726 = vmatprep.subr.mxu0 0.0
        %727 = vmatpush1.msra.mxu0 0.0
        %728 = vmatprep.subr.mxu0 0.0
        %729 = vmatpush1.msra.mxu0 0.0
        %730 = vmatprep.subr.mxu0 0.0
        %731 = vmatpush1.msra.mxu0 0.0
        %732 = vmatprep.subr.mxu0 0.0
        %733 = vmatpush1.msra.mxu0 0.0
        %734 = vmatprep.mubr.f32.mxu0 0.0
        %735 = vmatmul.mubr.f32.gmra.mrb[0].mxu0 %v520
        %v736 = vpop.f32.mrb[0].mxu0
        %v737 = vadd.f32 0.0, %v736
        %v738 = vpop.f32.mrb[0].mxu0
        %739 = vdwg.mxu0
        %741 = vrot.lane.b32.xlu0 %v589, 120
        %v742 = vpop.permute.xlu0 %741
        %744 = vrot.lane.b32.xlu0 %v589, 112
        %v745 = vpop.permute.xlu0 %744
        %747 = vrot.lane.b32.xlu0 %v589, 104
        %v748 = vpop.permute.xlu0 %747
        %v750 = vcombine.low %v589, %v745
        %v751 = vcombine.high %v589, %v745
        %v753 = vunpack.c.l.s4 1983009808
        %v754 = vunpack.c.0.s8 %v753
        %v755 = vlaneseq
        %v756 = vshrl.u32 %v755, 7
        %v757 = vsub.s32 %v754, %v756
        %v758 = vrot.slane %v750, %v757
        %v760 = vunpack.c.l.s4 1983009808
        %v761 = vunpack.c.0.s8 %v760
        %v762 = vlaneseq
        %v763 = vshrl.u32 %v762, 7
        %v764 = vsub.s32 %v761, %v763
        %v765 = vrot.slane %v751, %v764
        %v766 = vcombine.low %v742, %v748
        %v767 = vcombine.high %v742, %v748
        %v769 = vunpack.c.l.s4 1983009808
        %v770 = vunpack.c.0.s8 %v769
        %v771 = vlaneseq
        %v772 = vshrl.u32 %v771, 7
        %v773 = vsub.s32 %v770, %v772
        %v774 = vrot.slane %v766, %v773
        %v776 = vunpack.c.l.s4 1983009808
        %v777 = vunpack.c.0.s8 %v776
        %v778 = vlaneseq
        %v779 = vshrl.u32 %v778, 7
        %v780 = vsub.s32 %v777, %v779
        %v781 = vrot.slane %v767, %v780
        %v782 = vcombine.low %v758, %v774
        %v783 = vcombine.high %v758, %v774
        %v785 = vunpack.c.l.s4 1934713408
        %v786 = vunpack.c.0.s8 %v785
        %v787 = vlaneseq
        %v788 = vshrl.u32 %v787, 7
        %v789 = vsub.s32 %v786, %v788
        %v790 = vrot.slane %v782, %v789
        %v792 = vunpack.c.l.s4 1934713408
        %v793 = vunpack.c.0.s8 %v792
        %v794 = vlaneseq
        %v795 = vshrl.u32 %v794, 7
        %v796 = vsub.s32 %v793, %v795
        %v797 = vrot.slane %v783, %v796
        %v798 = vcombine.low %v765, %v781
        %v799 = vcombine.high %v765, %v781
        %v801 = vunpack.c.l.s4 1934713408
        %v802 = vunpack.c.0.s8 %v801
        %v803 = vlaneseq
        %v804 = vshrl.u32 %v803, 7
        %v805 = vsub.s32 %v802, %v804
        %v806 = vrot.slane %v798, %v805
        %v808 = vunpack.c.l.s4 1934713408
        %v809 = vunpack.c.0.s8 %v808
        %v810 = vlaneseq
        %v811 = vshrl.u32 %v810, 7
        %v812 = vsub.s32 %v809, %v811
        %v813 = vrot.slane %v799, %v812
        %v814 = vcombine.high %v790, 0.0
        %v815 = vcombine.high %v797, 0.0
        %v816 = vcombine.high %v806, 0.0
        %v817 = vcombine.high %v813, 0.0
        %v818 = vcombine.low %v790, %v797
        %v820 = vunpack.c.l.s4 1983009808
        %v821 = vunpack.c.0.s8 %v820
        %v822 = vlaneseq
        %v823 = vshrl.u32 %v822, 7
        %v824 = vsub.s32 %v821, %v823
        %v825 = vrot.slane %v818, %v824
        %v826 = vcombine.low %v814, %v815
        %v828 = vunpack.c.l.s4 1983009808
        %v829 = vunpack.c.0.s8 %v828
        %v830 = vlaneseq
        %v831 = vshrl.u32 %v830, 7
        %v832 = vsub.s32 %v829, %v831
        %v833 = vrot.slane %v826, %v832
        %v834 = vcombine.low %v806, %v813
        %v836 = vunpack.c.l.s4 1983009808
        %v837 = vunpack.c.0.s8 %v836
        %v838 = vlaneseq
        %v839 = vshrl.u32 %v838, 7
        %v840 = vsub.s32 %v837, %v839
        %v841 = vrot.slane %v834, %v840
        %v842 = vcombine.low %v816, %v817
        %v844 = vunpack.c.l.s4 1983009808
        %v845 = vunpack.c.0.s8 %v844
        %v846 = vlaneseq
        %v847 = vshrl.u32 %v846, 7
        %v848 = vsub.s32 %v845, %v847
        %v849 = vrot.slane %v842, %v848
        %v850 = vcombine.low %v825, %v833
        %v851 = vcombine.high %v825, %v833
        %v853 = vunpack.c.l.s4 1934713408
        %v854 = vunpack.c.0.s8 %v853
        %v855 = vlaneseq
        %v856 = vshrl.u32 %v855, 7
        %v857 = vsub.s32 %v854, %v856
        %v858 = vrot.slane %v850, %v857
        %v860 = vunpack.c.l.s4 1934713408
        %v861 = vunpack.c.0.s8 %v860
        %v862 = vlaneseq
        %v863 = vshrl.u32 %v862, 7
        %v864 = vsub.s32 %v861, %v863
        %v865 = vrot.slane %v851, %v864
        %v866 = vcombine.low %v841, %v849
        %v867 = vcombine.high %v841, %v849
        %v869 = vunpack.c.l.s4 1934713408
        %v870 = vunpack.c.0.s8 %v869
        %v871 = vlaneseq
        %v872 = vshrl.u32 %v871, 7
        %v873 = vsub.s32 %v870, %v872
        %v874 = vrot.slane %v866, %v873
        %v876 = vunpack.c.l.s4 1934713408
        %v877 = vunpack.c.0.s8 %v876
        %v878 = vlaneseq
        %v879 = vshrl.u32 %v878, 7
        %v880 = vsub.s32 %v877, %v879
        %v881 = vrot.slane %v867, %v880
        %v882 = vcombine.low %v858, %v874
        %v883 = vcombine.high %v858, %v874
        %v884 = vcombine.low %v865, %v881
        %v885 = vcombine.high %v865, %v881
        %887 = vrot.lane.b32.xlu0 %v663, 120
        %v888 = vpop.permute.xlu0 %887
        %890 = vrot.lane.b32.xlu0 %v663, 112
        %v891 = vpop.permute.xlu0 %890
        %893 = vrot.lane.b32.xlu0 %v663, 104
        %v894 = vpop.permute.xlu0 %893
        %v896 = vcombine.low %v663, %v891
        %v897 = vcombine.high %v663, %v891
        %v899 = vunpack.c.l.s4 1983009808
        %v900 = vunpack.c.0.s8 %v899
        %v901 = vlaneseq
        %v902 = vshrl.u32 %v901, 7
        %v903 = vsub.s32 %v900, %v902
        %v904 = vrot.slane %v896, %v903
        %v906 = vunpack.c.l.s4 1983009808
        %v907 = vunpack.c.0.s8 %v906
        %v908 = vlaneseq
        %v909 = vshrl.u32 %v908, 7
        %v910 = vsub.s32 %v907, %v909
        %v911 = vrot.slane %v897, %v910
        %v912 = vcombine.low %v888, %v894
        %v913 = vcombine.high %v888, %v894
        %v915 = vunpack.c.l.s4 1983009808
        %v916 = vunpack.c.0.s8 %v915
        %v917 = vlaneseq
        %v918 = vshrl.u32 %v917, 7
        %v919 = vsub.s32 %v916, %v918
        %v920 = vrot.slane %v912, %v919
        %v922 = vunpack.c.l.s4 1983009808
        %v923 = vunpack.c.0.s8 %v922
        %v924 = vlaneseq
        %v925 = vshrl.u32 %v924, 7
        %v926 = vsub.s32 %v923, %v925
        %v927 = vrot.slane %v913, %v926
        %v928 = vcombine.low %v904, %v920
        %v929 = vcombine.high %v904, %v920
        %v931 = vunpack.c.l.s4 1934713408
        %v932 = vunpack.c.0.s8 %v931
        %v933 = vlaneseq
        %v934 = vshrl.u32 %v933, 7
        %v935 = vsub.s32 %v932, %v934
        %v936 = vrot.slane %v928, %v935
        %v938 = vunpack.c.l.s4 1934713408
        %v939 = vunpack.c.0.s8 %v938
        %v940 = vlaneseq
        %v941 = vshrl.u32 %v940, 7
        %v942 = vsub.s32 %v939, %v941
        %v943 = vrot.slane %v929, %v942
        %v944 = vcombine.low %v911, %v927
        %v945 = vcombine.high %v911, %v927
        %v947 = vunpack.c.l.s4 1934713408
        %v948 = vunpack.c.0.s8 %v947
        %v949 = vlaneseq
        %v950 = vshrl.u32 %v949, 7
        %v951 = vsub.s32 %v948, %v950
        %v952 = vrot.slane %v944, %v951
        %v954 = vunpack.c.l.s4 1934713408
        %v955 = vunpack.c.0.s8 %v954
        %v956 = vlaneseq
        %v957 = vshrl.u32 %v956, 7
        %v958 = vsub.s32 %v955, %v957
        %v959 = vrot.slane %v945, %v958
        %v960 = vcombine.high %v936, 0.0
        %v961 = vcombine.high %v943, 0.0
        %v962 = vcombine.high %v952, 0.0
        %v963 = vcombine.high %v959, 0.0
        %v964 = vcombine.low %v936, %v943
        %v966 = vunpack.c.l.s4 1983009808
        %v967 = vunpack.c.0.s8 %v966
        %v968 = vlaneseq
        %v969 = vshrl.u32 %v968, 7
        %v970 = vsub.s32 %v967, %v969
        %v971 = vrot.slane %v964, %v970
        %v972 = vcombine.low %v960, %v961
        %v974 = vunpack.c.l.s4 1983009808
        %v975 = vunpack.c.0.s8 %v974
        %v976 = vlaneseq
        %v977 = vshrl.u32 %v976, 7
        %v978 = vsub.s32 %v975, %v977
        %v979 = vrot.slane %v972, %v978
        %v980 = vcombine.low %v952, %v959
        %v982 = vunpack.c.l.s4 1983009808
        %v983 = vunpack.c.0.s8 %v982
        %v984 = vlaneseq
        %v985 = vshrl.u32 %v984, 7
        %v986 = vsub.s32 %v983, %v985
        %v987 = vrot.slane %v980, %v986
        %v988 = vcombine.low %v962, %v963
        %v990 = vunpack.c.l.s4 1983009808
        %v991 = vunpack.c.0.s8 %v990
        %v992 = vlaneseq
        %v993 = vshrl.u32 %v992, 7
        %v994 = vsub.s32 %v991, %v993
        %v995 = vrot.slane %v988, %v994
        %v996 = vcombine.low %v971, %v979
        %v997 = vcombine.high %v971, %v979
        %v999 = vunpack.c.l.s4 1934713408
        %v1000 = vunpack.c.0.s8 %v999
        %v1001 = vlaneseq
        %v1002 = vshrl.u32 %v1001, 7
        %v1003 = vsub.s32 %v1000, %v1002
        %v1004 = vrot.slane %v996, %v1003
        %v1006 = vunpack.c.l.s4 1934713408
        %v1007 = vunpack.c.0.s8 %v1006
        %v1008 = vlaneseq
        %v1009 = vshrl.u32 %v1008, 7
        %v1010 = vsub.s32 %v1007, %v1009
        %v1011 = vrot.slane %v997, %v1010
        %v1012 = vcombine.low %v987, %v995
        %v1013 = vcombine.high %v987, %v995
        %v1015 = vunpack.c.l.s4 1934713408
        %v1016 = vunpack.c.0.s8 %v1015
        %v1017 = vlaneseq
        %v1018 = vshrl.u32 %v1017, 7
        %v1019 = vsub.s32 %v1016, %v1018
        %v1020 = vrot.slane %v1012, %v1019
        %v1022 = vunpack.c.l.s4 1934713408
        %v1023 = vunpack.c.0.s8 %v1022
        %v1024 = vlaneseq
        %v1025 = vshrl.u32 %v1024, 7
        %v1026 = vsub.s32 %v1023, %v1025
        %v1027 = vrot.slane %v1013, %v1026
        %v1028 = vcombine.low %v1004, %v1020
        %v1029 = vcombine.high %v1004, %v1020
        %v1030 = vcombine.low %v1011, %v1027
        %v1031 = vcombine.high %v1011, %v1027
        %1033 = vrot.lane.b32.xlu0 %v737, 120
        %v1034 = vpop.permute.xlu0 %1033
        %1036 = vrot.lane.b32.xlu0 %v737, 112
        %v1037 = vpop.permute.xlu0 %1036
        %1039 = vrot.lane.b32.xlu0 %v737, 104
        %v1040 = vpop.permute.xlu0 %1039
        %v1042 = vcombine.low %v737, %v1037
        %v1043 = vcombine.high %v737, %v1037
        %v1045 = vunpack.c.l.s4 1983009808
        %v1046 = vunpack.c.0.s8 %v1045
        %v1047 = vlaneseq
        %v1048 = vshrl.u32 %v1047, 7
        %v1049 = vsub.s32 %v1046, %v1048
        %v1050 = vrot.slane %v1042, %v1049
        %v1052 = vunpack.c.l.s4 1983009808
        %v1053 = vunpack.c.0.s8 %v1052
        %v1054 = vlaneseq
        %v1055 = vshrl.u32 %v1054, 7
        %v1056 = vsub.s32 %v1053, %v1055
        %v1057 = vrot.slane %v1043, %v1056
        %v1058 = vcombine.low %v1034, %v1040
        %v1059 = vcombine.high %v1034, %v1040
        %v1061 = vunpack.c.l.s4 1983009808
        %v1062 = vunpack.c.0.s8 %v1061
        %v1063 = vlaneseq
        %v1064 = vshrl.u32 %v1063, 7
        %v1065 = vsub.s32 %v1062, %v1064
        %v1066 = vrot.slane %v1058, %v1065
        %v1068 = vunpack.c.l.s4 1983009808
        %v1069 = vunpack.c.0.s8 %v1068
        %v1070 = vlaneseq
        %v1071 = vshrl.u32 %v1070, 7
        %v1072 = vsub.s32 %v1069, %v1071
        %v1073 = vrot.slane %v1059, %v1072
        %v1074 = vcombine.low %v1050, %v1066
        %v1075 = vcombine.high %v1050, %v1066
        %v1077 = vunpack.c.l.s4 1934713408
        %v1078 = vunpack.c.0.s8 %v1077
        %v1079 = vlaneseq
        %v1080 = vshrl.u32 %v1079, 7
        %v1081 = vsub.s32 %v1078, %v1080
        %v1082 = vrot.slane %v1074, %v1081
        %v1084 = vunpack.c.l.s4 1934713408
        %v1085 = vunpack.c.0.s8 %v1084
        %v1086 = vlaneseq
        %v1087 = vshrl.u32 %v1086, 7
        %v1088 = vsub.s32 %v1085, %v1087
        %v1089 = vrot.slane %v1075, %v1088
        %v1090 = vcombine.low %v1057, %v1073
        %v1091 = vcombine.high %v1057, %v1073
        %v1093 = vunpack.c.l.s4 1934713408
        %v1094 = vunpack.c.0.s8 %v1093
        %v1095 = vlaneseq
        %v1096 = vshrl.u32 %v1095, 7
        %v1097 = vsub.s32 %v1094, %v1096
        %v1098 = vrot.slane %v1090, %v1097
        %v1100 = vunpack.c.l.s4 1934713408
        %v1101 = vunpack.c.0.s8 %v1100
        %v1102 = vlaneseq
        %v1103 = vshrl.u32 %v1102, 7
        %v1104 = vsub.s32 %v1101, %v1103
        %v1105 = vrot.slane %v1091, %v1104
        %v1106 = vcombine.high %v1082, 0.0
        %v1107 = vcombine.high %v1089, 0.0
        %v1108 = vcombine.high %v1098, 0.0
        %v1109 = vcombine.high %v1105, 0.0
        %v1110 = vcombine.low %v1082, %v1089
        %v1112 = vunpack.c.l.s4 1983009808
        %v1113 = vunpack.c.0.s8 %v1112
        %v1114 = vlaneseq
        %v1115 = vshrl.u32 %v1114, 7
        %v1116 = vsub.s32 %v1113, %v1115
        %v1117 = vrot.slane %v1110, %v1116
        %v1118 = vcombine.low %v1106, %v1107
        %v1120 = vunpack.c.l.s4 1983009808
        %v1121 = vunpack.c.0.s8 %v1120
        %v1122 = vlaneseq
        %v1123 = vshrl.u32 %v1122, 7
        %v1124 = vsub.s32 %v1121, %v1123
        %v1125 = vrot.slane %v1118, %v1124
        %v1126 = vcombine.low %v1098, %v1105
        %v1128 = vunpack.c.l.s4 1983009808
        %v1129 = vunpack.c.0.s8 %v1128
        %v1130 = vlaneseq
        %v1131 = vshrl.u32 %v1130, 7
        %v1132 = vsub.s32 %v1129, %v1131
        %v1133 = vrot.slane %v1126, %v1132
        %v1134 = vcombine.low %v1108, %v1109
        %v1136 = vunpack.c.l.s4 1983009808
        %v1137 = vunpack.c.0.s8 %v1136
        %v1138 = vlaneseq
        %v1139 = vshrl.u32 %v1138, 7
        %v1140 = vsub.s32 %v1137, %v1139
        %v1141 = vrot.slane %v1134, %v1140
        %v1142 = vcombine.low %v1117, %v1125
        %v1143 = vcombine.high %v1117, %v1125
        %v1145 = vunpack.c.l.s4 1934713408
        %v1146 = vunpack.c.0.s8 %v1145
        %v1147 = vlaneseq
        %v1148 = vshrl.u32 %v1147, 7
        %v1149 = vsub.s32 %v1146, %v1148
        %v1150 = vrot.slane %v1142, %v1149
        %v1152 = vunpack.c.l.s4 1934713408
        %v1153 = vunpack.c.0.s8 %v1152
        %v1154 = vlaneseq
        %v1155 = vshrl.u32 %v1154, 7
        %v1156 = vsub.s32 %v1153, %v1155
        %v1157 = vrot.slane %v1143, %v1156
        %v1158 = vcombine.low %v1133, %v1141
        %v1159 = vcombine.high %v1133, %v1141
        %v1161 = vunpack.c.l.s4 1934713408
        %v1162 = vunpack.c.0.s8 %v1161
        %v1163 = vlaneseq
        %v1164 = vshrl.u32 %v1163, 7
        %v1165 = vsub.s32 %v1162, %v1164
        %v1166 = vrot.slane %v1158, %v1165
        %v1168 = vunpack.c.l.s4 1934713408
        %v1169 = vunpack.c.0.s8 %v1168
        %v1170 = vlaneseq
        %v1171 = vshrl.u32 %v1170, 7
        %v1172 = vsub.s32 %v1169, %v1171
        %v1173 = vrot.slane %v1159, %v1172
        %v1174 = vcombine.low %v1150, %v1166
        %v1175 = vcombine.high %v1150, %v1166
        %v1176 = vcombine.low %v1157, %v1173
        %v1177 = vcombine.high %v1157, %v1173
        %vm1178 = vcmask 64512
        %v1180 = vsel %vm1178, %v882, 0
        %v1183 = vsel %vm1178, %v1028, 0
        %1185 = vmatprep.subr.mxu0 0.0
        %1186 = vmatpush1.xpose.msra.mxu0 %v1183
        %1187 = vmatprep.subr.mxu0 0.0
        %1188 = vmatpush1.xpose.msra.mxu0 0.0
        %1189 = vmatprep.subr.mxu0 0.0
        %1190 = vmatpush1.xpose.msra.mxu0 0.0
        %1191 = vmatprep.subr.mxu0 0.0
        %1192 = vmatpush1.xpose.msra.mxu0 0.0
        %1193 = vmatprep.subr.mxu0 0.0
        %1194 = vmatpush1.xpose.msra.mxu0 0.0
        %1195 = vmatprep.subr.mxu0 0.0
        %1196 = vmatpush1.xpose.msra.mxu0 0.0
        %1197 = vmatprep.subr.mxu0 0.0
        %1198 = vmatpush1.xpose.msra.mxu0 0.0
        %1199 = vmatprep.subr.mxu0 0.0
        %1200 = vmatpush1.xpose.msra.mxu0 0.0
        %1201 = vmatprep.subr.mxu0 0.0
        %1202 = vmatpush1.xpose.msra.mxu0 0.0
        %1203 = vmatprep.subr.mxu0 0.0
        %1204 = vmatpush1.xpose.msra.mxu0 0.0
        %1205 = vmatprep.subr.mxu0 0.0
        %1206 = vmatpush1.xpose.msra.mxu0 0.0
        %1207 = vmatprep.subr.mxu0 0.0
        %1208 = vmatpush1.xpose.msra.mxu0 0.0
        %1209 = vmatprep.subr.mxu0 0.0
        %1210 = vmatpush1.xpose.msra.mxu0 0.0
        %1211 = vmatprep.subr.mxu0 0.0
        %1212 = vmatpush1.xpose.msra.mxu0 0.0
        %1213 = vmatprep.subr.mxu0 0.0
        %1214 = vmatpush1.xpose.msra.mxu0 0.0
        %1215 = vmatprep.subr.mxu0 0.0
        %1216 = vmatpush1.xpose.msra.mxu0 0.0
        %1217 = vmatprep.subr.mxu0 0.0
        %1218 = vmatpush1.xpose.msra.mxu0 0.0
        %1219 = vmatprep.subr.mxu0 0.0
        %1220 = vmatpush1.xpose.msra.mxu0 0.0
        %1221 = vmatprep.subr.mxu0 0.0
        %1222 = vmatpush1.xpose.msra.mxu0 0.0
        %1223 = vmatprep.subr.mxu0 0.0
        %1224 = vmatpush1.xpose.msra.mxu0 0.0
        %1225 = vmatprep.subr.mxu0 0.0
        %1226 = vmatpush1.xpose.msra.mxu0 0.0
        %1227 = vmatprep.subr.mxu0 0.0
        %1228 = vmatpush1.xpose.msra.mxu0 0.0
        %1229 = vmatprep.subr.mxu0 0.0
        %1230 = vmatpush1.xpose.msra.mxu0 0.0
        %1231 = vmatprep.subr.mxu0 0.0
        %1232 = vmatpush1.xpose.msra.mxu0 0.0
        %1233 = vmatprep.subr.mxu0 0.0
        %1234 = vmatpush1.xpose.msra.mxu0 0.0
        %1235 = vmatprep.subr.mxu0 0.0
        %1236 = vmatpush1.xpose.msra.mxu0 0.0
        %1237 = vmatprep.subr.mxu0 0.0
        %1238 = vmatpush1.xpose.msra.mxu0 0.0
        %1239 = vmatprep.subr.mxu0 0.0
        %1240 = vmatpush1.xpose.msra.mxu0 0.0
        %1241 = vmatprep.subr.mxu0 0.0
        %1242 = vmatpush1.xpose.msra.mxu0 0.0
        %1243 = vmatprep.subr.mxu0 0.0
        %1244 = vmatpush1.xpose.msra.mxu0 0.0
        %1245 = vmatprep.subr.mxu0 0.0
        %1246 = vmatpush1.xpose.msra.mxu0 0.0
        %1247 = vmatprep.subr.mxu0 0.0
        %1248 = vmatpush1.xpose.msra.mxu0 0.0
        %1249 = vmatprep.mubr.f32.mxu0 0.0
        %1250 = vmatmul.mubr.f32.gmra.mrb[0].mxu0 %v1180
        %v1251 = vpop.f32.mrb[0].mxu0
        %v1252 = vadd.f32 0.0, %v1251
        %v1253 = vpop.f32.mrb[0].mxu0
        %1254 = vdwg.mxu0
        %v1256 = vsel %vm1178, %v883, 0
        %v1259 = vsel %vm1178, %v1029, 0
        %1261 = vmatprep.subr.mxu0 0.0
        %1262 = vmatpush1.xpose.msra.mxu0 %v1259
        %1263 = vmatprep.subr.mxu0 0.0
        %1264 = vmatpush1.xpose.msra.mxu0 0.0
        %1265 = vmatprep.subr.mxu0 0.0
        %1266 = vmatpush1.xpose.msra.mxu0 0.0
        %1267 = vmatprep.subr.mxu0 0.0
        %1268 = vmatpush1.xpose.msra.mxu0 0.0
        %1269 = vmatprep.subr.mxu0 0.0
        %1270 = vmatpush1.xpose.msra.mxu0 0.0
        %1271 = vmatprep.subr.mxu0 0.0
        %1272 = vmatpush1.xpose.msra.mxu0 0.0
        %1273 = vmatprep.subr.mxu0 0.0
        %1274 = vmatpush1.xpose.msra.mxu0 0.0
        %1275 = vmatprep.subr.mxu0 0.0
        %1276 = vmatpush1.xpose.msra.mxu0 0.0
        %1277 = vmatprep.subr.mxu0 0.0
        %1278 = vmatpush1.xpose.msra.mxu0 0.0
        %1279 = vmatprep.subr.mxu0 0.0
        %1280 = vmatpush1.xpose.msra.mxu0 0.0
        %1281 = vmatprep.subr.mxu0 0.0
        %1282 = vmatpush1.xpose.msra.mxu0 0.0
        %1283 = vmatprep.subr.mxu0 0.0
        %1284 = vmatpush1.xpose.msra.mxu0 0.0
        %1285 = vmatprep.subr.mxu0 0.0
        %1286 = vmatpush1.xpose.msra.mxu0 0.0
        %1287 = vmatprep.subr.mxu0 0.0
        %1288 = vmatpush1.xpose.msra.mxu0 0.0
        %1289 = vmatprep.subr.mxu0 0.0
        %1290 = vmatpush1.xpose.msra.mxu0 0.0
        %1291 = vmatprep.subr.mxu0 0.0
        %1292 = vmatpush1.xpose.msra.mxu0 0.0
        %1293 = vmatprep.subr.mxu0 0.0
        %1294 = vmatpush1.xpose.msra.mxu0 0.0
        %1295 = vmatprep.subr.mxu0 0.0
        %1296 = vmatpush1.xpose.msra.mxu0 0.0
        %1297 = vmatprep.subr.mxu0 0.0
        %1298 = vmatpush1.xpose.msra.mxu0 0.0
        %1299 = vmatprep.subr.mxu0 0.0
        %1300 = vmatpush1.xpose.msra.mxu0 0.0
        %1301 = vmatprep.subr.mxu0 0.0
        %1302 = vmatpush1.xpose.msra.mxu0 0.0
        %1303 = vmatprep.subr.mxu0 0.0
        %1304 = vmatpush1.xpose.msra.mxu0 0.0
        %1305 = vmatprep.subr.mxu0 0.0
        %1306 = vmatpush1.xpose.msra.mxu0 0.0
        %1307 = vmatprep.subr.mxu0 0.0
        %1308 = vmatpush1.xpose.msra.mxu0 0.0
        %1309 = vmatprep.subr.mxu0 0.0
        %1310 = vmatpush1.xpose.msra.mxu0 0.0
        %1311 = vmatprep.subr.mxu0 0.0
        %1312 = vmatpush1.xpose.msra.mxu0 0.0
        %1313 = vmatprep.subr.mxu0 0.0
        %1314 = vmatpush1.xpose.msra.mxu0 0.0
        %1315 = vmatprep.subr.mxu0 0.0
        %1316 = vmatpush1.xpose.msra.mxu0 0.0
        %1317 = vmatprep.subr.mxu0 0.0
        %1318 = vmatpush1.xpose.msra.mxu0 0.0
        %1319 = vmatprep.subr.mxu0 0.0
        %1320 = vmatpush1.xpose.msra.mxu0 0.0
        %1321 = vmatprep.subr.mxu0 0.0
        %1322 = vmatpush1.xpose.msra.mxu0 0.0
        %1323 = vmatprep.subr.mxu0 0.0
        %1324 = vmatpush1.xpose.msra.mxu0 0.0
        %1325 = vmatprep.mubr.f32.mxu0 0.0
        %1326 = vmatmul.mubr.f32.gmra.mrb[0].mxu0 %v1256
        %v1327 = vpop.f32.mrb[0].mxu0
        %v1328 = vadd.f32 0.0, %v1327
        %v1329 = vpop.f32.mrb[0].mxu0
        %1330 = vdwg.mxu0
        %v1332 = vsel %vm1178, %v884, 0
        %v1335 = vsel %vm1178, %v1030, 0
        %1337 = vmatprep.subr.mxu0 0.0
        %1338 = vmatpush1.xpose.msra.mxu0 %v1335
        %1339 = vmatprep.subr.mxu0 0.0
        %1340 = vmatpush1.xpose.msra.mxu0 0.0
        %1341 = vmatprep.subr.mxu0 0.0
        %1342 = vmatpush1.xpose.msra.mxu0 0.0
        %1343 = vmatprep.subr.mxu0 0.0
        %1344 = vmatpush1.xpose.msra.mxu0 0.0
        %1345 = vmatprep.subr.mxu0 0.0
        %1346 = vmatpush1.xpose.msra.mxu0 0.0
        %1347 = vmatprep.subr.mxu0 0.0
        %1348 = vmatpush1.xpose.msra.mxu0 0.0
        %1349 = vmatprep.subr.mxu0 0.0
        %1350 = vmatpush1.xpose.msra.mxu0 0.0
        %1351 = vmatprep.subr.mxu0 0.0
        %1352 = vmatpush1.xpose.msra.mxu0 0.0
        %1353 = vmatprep.subr.mxu0 0.0
        %1354 = vmatpush1.xpose.msra.mxu0 0.0
        %1355 = vmatprep.subr.mxu0 0.0
        %1356 = vmatpush1.xpose.msra.mxu0 0.0
        %1357 = vmatprep.subr.mxu0 0.0
        %1358 = vmatpush1.xpose.msra.mxu0 0.0
        %1359 = vmatprep.subr.mxu0 0.0
        %1360 = vmatpush1.xpose.msra.mxu0 0.0
        %1361 = vmatprep.subr.mxu0 0.0
        %1362 = vmatpush1.xpose.msra.mxu0 0.0
        %1363 = vmatprep.subr.mxu0 0.0
        %1364 = vmatpush1.xpose.msra.mxu0 0.0
        %1365 = vmatprep.subr.mxu0 0.0
        %1366 = vmatpush1.xpose.msra.mxu0 0.0
        %1367 = vmatprep.subr.mxu0 0.0
        %1368 = vmatpush1.xpose.msra.mxu0 0.0
        %1369 = vmatprep.subr.mxu0 0.0
        %1370 = vmatpush1.xpose.msra.mxu0 0.0
        %1371 = vmatprep.subr.mxu0 0.0
        %1372 = vmatpush1.xpose.msra.mxu0 0.0
        %1373 = vmatprep.subr.mxu0 0.0
        %1374 = vmatpush1.xpose.msra.mxu0 0.0
        %1375 = vmatprep.subr.mxu0 0.0
        %1376 = vmatpush1.xpose.msra.mxu0 0.0
        %1377 = vmatprep.subr.mxu0 0.0
        %1378 = vmatpush1.xpose.msra.mxu0 0.0
        %1379 = vmatprep.subr.mxu0 0.0
        %1380 = vmatpush1.xpose.msra.mxu0 0.0
        %1381 = vmatprep.subr.mxu0 0.0
        %1382 = vmatpush1.xpose.msra.mxu0 0.0
        %1383 = vmatprep.subr.mxu0 0.0
        %1384 = vmatpush1.xpose.msra.mxu0 0.0
        %1385 = vmatprep.subr.mxu0 0.0
        %1386 = vmatpush1.xpose.msra.mxu0 0.0
        %1387 = vmatprep.subr.mxu0 0.0
        %1388 = vmatpush1.xpose.msra.mxu0 0.0
        %1389 = vmatprep.subr.mxu0 0.0
        %1390 = vmatpush1.xpose.msra.mxu0 0.0
        %1391 = vmatprep.subr.mxu0 0.0
        %1392 = vmatpush1.xpose.msra.mxu0 0.0
        %1393 = vmatprep.subr.mxu0 0.0
        %1394 = vmatpush1.xpose.msra.mxu0 0.0
        %1395 = vmatprep.subr.mxu0 0.0
        %1396 = vmatpush1.xpose.msra.mxu0 0.0
        %1397 = vmatprep.subr.mxu0 0.0
        %1398 = vmatpush1.xpose.msra.mxu0 0.0
        %1399 = vmatprep.subr.mxu0 0.0
        %1400 = vmatpush1.xpose.msra.mxu0 0.0
        %1401 = vmatprep.mubr.f32.mxu0 0.0
        %1402 = vmatmul.mubr.f32.gmra.mrb[0].mxu0 %v1332
        %v1403 = vpop.f32.mrb[0].mxu0
        %v1404 = vadd.f32 0.0, %v1403
        %v1405 = vpop.f32.mrb[0].mxu0
        %1406 = vdwg.mxu0
        %v1408 = vsel %vm1178, %v885, 0
        %v1411 = vsel %vm1178, %v1031, 0
        %1413 = vmatprep.subr.mxu0 0.0
        %1414 = vmatpush1.xpose.msra.mxu0 %v1411
        %1415 = vmatprep.subr.mxu0 0.0
        %1416 = vmatpush1.xpose.msra.mxu0 0.0
        %1417 = vmatprep.subr.mxu0 0.0
        %1418 = vmatpush1.xpose.msra.mxu0 0.0
        %1419 = vmatprep.subr.mxu0 0.0
        %1420 = vmatpush1.xpose.msra.mxu0 0.0
        %1421 = vmatprep.subr.mxu0 0.0
        %1422 = vmatpush1.xpose.msra.mxu0 0.0
        %1423 = vmatprep.subr.mxu0 0.0
        %1424 = vmatpush1.xpose.msra.mxu0 0.0
        %1425 = vmatprep.subr.mxu0 0.0
        %1426 = vmatpush1.xpose.msra.mxu0 0.0
        %1427 = vmatprep.subr.mxu0 0.0
        %1428 = vmatpush1.xpose.msra.mxu0 0.0
        %1429 = vmatprep.subr.mxu0 0.0
        %1430 = vmatpush1.xpose.msra.mxu0 0.0
        %1431 = vmatprep.subr.mxu0 0.0
        %1432 = vmatpush1.xpose.msra.mxu0 0.0
        %1433 = vmatprep.subr.mxu0 0.0
        %1434 = vmatpush1.xpose.msra.mxu0 0.0
        %1435 = vmatprep.subr.mxu0 0.0
        %1436 = vmatpush1.xpose.msra.mxu0 0.0
        %1437 = vmatprep.subr.mxu0 0.0
        %1438 = vmatpush1.xpose.msra.mxu0 0.0
        %1439 = vmatprep.subr.mxu0 0.0
        %1440 = vmatpush1.xpose.msra.mxu0 0.0
        %1441 = vmatprep.subr.mxu0 0.0
        %1442 = vmatpush1.xpose.msra.mxu0 0.0
        %1443 = vmatprep.subr.mxu0 0.0
        %1444 = vmatpush1.xpose.msra.mxu0 0.0
        %1445 = vmatprep.subr.mxu0 0.0
        %1446 = vmatpush1.xpose.msra.mxu0 0.0
        %1447 = vmatprep.subr.mxu0 0.0
        %1448 = vmatpush1.xpose.msra.mxu0 0.0
        %1449 = vmatprep.subr.mxu0 0.0
        %1450 = vmatpush1.xpose.msra.mxu0 0.0
        %1451 = vmatprep.subr.mxu0 0.0
        %1452 = vmatpush1.xpose.msra.mxu0 0.0
        %1453 = vmatprep.subr.mxu0 0.0
        %1454 = vmatpush1.xpose.msra.mxu0 0.0
        %1455 = vmatprep.subr.mxu0 0.0
        %1456 = vmatpush1.xpose.msra.mxu0 0.0
        %1457 = vmatprep.subr.mxu0 0.0
        %1458 = vmatpush1.xpose.msra.mxu0 0.0
        %1459 = vmatprep.subr.mxu0 0.0
        %1460 = vmatpush1.xpose.msra.mxu0 0.0
        %1461 = vmatprep.subr.mxu0 0.0
        %1462 = vmatpush1.xpose.msra.mxu0 0.0
        %1463 = vmatprep.subr.mxu0 0.0
        %1464 = vmatpush1.xpose.msra.mxu0 0.0
        %1465 = vmatprep.subr.mxu0 0.0
        %1466 = vmatpush1.xpose.msra.mxu0 0.0
        %1467 = vmatprep.subr.mxu0 0.0
        %1468 = vmatpush1.xpose.msra.mxu0 0.0
        %1469 = vmatprep.subr.mxu0 0.0
        %1470 = vmatpush1.xpose.msra.mxu0 0.0
        %1471 = vmatprep.subr.mxu0 0.0
        %1472 = vmatpush1.xpose.msra.mxu0 0.0
        %1473 = vmatprep.subr.mxu0 0.0
        %1474 = vmatpush1.xpose.msra.mxu0 0.0
        %1475 = vmatprep.subr.mxu0 0.0
        %1476 = vmatpush1.xpose.msra.mxu0 0.0
        %1477 = vmatprep.mubr.f32.mxu0 0.0
        %1478 = vmatmul.mubr.f32.gmra.mrb[0].mxu0 %v1408
        %v1479 = vpop.f32.mrb[0].mxu0
        %v1480 = vadd.f32 0.0, %v1479
        %v1481 = vpop.f32.mrb[0].mxu0
        %1482 = vdwg.mxu0
        %v1483 = vsel %vm1178, %v1252, -inf
        %1484 = vmax.xlane.f32.xlu0 %v1483
        %v1485 = vpop.xlane.xlu0 %1484
        %v1486 = vsel %vm1178, %v1328, -inf
        %1487 = vmax.xlane.f32.xlu0 %v1486
        %v1488 = vpop.xlane.xlu0 %1487
        %v1489 = vsel %vm1178, %v1404, -inf
        %1490 = vmax.xlane.f32.xlu0 %v1489
        %v1491 = vpop.xlane.xlu0 %1490
        %v1492 = vsel %vm1178, %v1480, -inf
        %1493 = vmax.xlane.f32.xlu0 %v1492
        %v1494 = vpop.xlane.xlu0 %1493
        %v1495 = vsub.f32 %v1252, %v1485
        %v1496 = vsub.f32 %v1328, %v1488
        %v1497 = vsub.f32 %v1404, %v1491
        %v1498 = vsub.f32 %v1480, %v1494
        %v1499 = vmul.f32 %v1495, 1.442695
        %v1500 = vpow.pop %v1499
        %v1501 = vmul.f32 %v1496, 1.442695
        %v1502 = vpow.pop %v1501
        %v1503 = vmul.f32 %v1497, 1.442695
        %v1504 = vpow.pop %v1503
        %v1505 = vmul.f32 %v1498, 1.442695
        %v1506 = vpow.pop %v1505
        %v1507 = vsel %vm1178, %v1500, 0.0
        %1508 = vadd.xlane.f32.xlu0 %v1507
        %v1509 = vpop.xlane.xlu0 %1508
        %v1510 = vsel %vm1178, %v1502, 0.0
        %1511 = vadd.xlane.f32.xlu0 %v1510
        %v1512 = vpop.xlane.xlu0 %1511
        %v1513 = vsel %vm1178, %v1504, 0.0
        %1514 = vadd.xlane.f32.xlu0 %v1513
        %v1515 = vpop.xlane.xlu0 %1514
        %v1516 = vsel %vm1178, %v1506, 0.0
        %1517 = vadd.xlane.f32.xlu0 %v1516
        %v1518 = vpop.xlane.xlu0 %1517
        %v1519 = vrcp.pop %v1509
        %v1520 = vrcp.pop %v1512
        %v1521 = vrcp.pop %v1515
        %v1522 = vrcp.pop %v1518
        %v1523 = vmul.f32 %v1500, %v1519
        %v1524 = vmul.f32 %v1502, %v1520
        %v1525 = vmul.f32 %v1504, %v1521
        %v1526 = vmul.f32 %v1506, %v1522
        %v1528 = vsel %vm1178, %v1523, 0
        %1530 = vmatprep.subr.mxu0 0.0
        %1531 = vmatpush1.msra.mxu0 %v1174
        %1532 = vmatprep.subr.mxu0 0.0
        %1533 = vmatpush1.msra.mxu0 0.0
        %1534 = vmatprep.subr.mxu0 0.0
        %1535 = vmatpush1.msra.mxu0 0.0
        %1536 = vmatprep.subr.mxu0 0.0
        %1537 = vmatpush1.msra.mxu0 0.0
        %1538 = vmatprep.subr.mxu0 0.0
        %1539 = vmatpush1.msra.mxu0 0.0
        %1540 = vmatprep.subr.mxu0 0.0
        %1541 = vmatpush1.msra.mxu0 0.0
        %1542 = vmatprep.subr.mxu0 0.0
        %1543 = vmatpush1.msra.mxu0 0.0
        %1544 = vmatprep.subr.mxu0 0.0
        %1545 = vmatpush1.msra.mxu0 0.0
        %1546 = vmatprep.subr.mxu0 0.0
        %1547 = vmatpush1.msra.mxu0 0.0
        %1548 = vmatprep.subr.mxu0 0.0
        %1549 = vmatpush1.msra.mxu0 0.0
        %1550 = vmatprep.subr.mxu0 0.0
        %1551 = vmatpush1.msra.mxu0 0.0
        %1552 = vmatprep.subr.mxu0 0.0
        %1553 = vmatpush1.msra.mxu0 0.0
        %1554 = vmatprep.subr.mxu0 0.0
        %1555 = vmatpush1.msra.mxu0 0.0
        %1556 = vmatprep.subr.mxu0 0.0
        %1557 = vmatpush1.msra.mxu0 0.0
        %1558 = vmatprep.subr.mxu0 0.0
        %1559 = vmatpush1.msra.mxu0 0.0
        %1560 = vmatprep.subr.mxu0 0.0
        %1561 = vmatpush1.msra.mxu0 0.0
        %1562 = vmatprep.subr.mxu0 0.0
        %1563 = vmatpush1.msra.mxu0 0.0
        %1564 = vmatprep.subr.mxu0 0.0
        %1565 = vmatpush1.msra.mxu0 0.0
        %1566 = vmatprep.subr.mxu0 0.0
        %1567 = vmatpush1.msra.mxu0 0.0
        %1568 = vmatprep.subr.mxu0 0.0
        %1569 = vmatpush1.msra.mxu0 0.0
        %1570 = vmatprep.subr.mxu0 0.0
        %1571 = vmatpush1.msra.mxu0 0.0
        %1572 = vmatprep.subr.mxu0 0.0
        %1573 = vmatpush1.msra.mxu0 0.0
        %1574 = vmatprep.subr.mxu0 0.0
        %1575 = vmatpush1.msra.mxu0 0.0
        %1576 = vmatprep.subr.mxu0 0.0
        %1577 = vmatpush1.msra.mxu0 0.0
        %1578 = vmatprep.subr.mxu0 0.0
        %1579 = vmatpush1.msra.mxu0 0.0
        %1580 = vmatprep.subr.mxu0 0.0
        %1581 = vmatpush1.msra.mxu0 0.0
        %1582 = vmatprep.subr.mxu0 0.0
        %1583 = vmatpush1.msra.mxu0 0.0
        %1584 = vmatprep.subr.mxu0 0.0
        %1585 = vmatpush1.msra.mxu0 0.0
        %1586 = vmatprep.subr.mxu0 0.0
        %1587 = vmatpush1.msra.mxu0 0.0
        %1588 = vmatprep.subr.mxu0 0.0
        %1589 = vmatpush1.msra.mxu0 0.0
        %1590 = vmatprep.subr.mxu0 0.0
        %1591 = vmatpush1.msra.mxu0 0.0
        %1592 = vmatprep.subr.mxu0 0.0
        %1593 = vmatpush1.msra.mxu0 0.0
        %1594 = vmatprep.mubr.f32.mxu0 0.0
        %1595 = vmatmul.mubr.f32.gmra.mrb[0].mxu0 %v1528
        %v1596 = vpop.f32.mrb[0].mxu0
        %v1597 = vadd.f32 0.0, %v1596
        %v1598 = vpop.f32.mrb[0].mxu0
        %1599 = vdwg.mxu0
        %v1601 = vsel %vm1178, %v1524, 0
        %1603 = vmatprep.subr.mxu0 0.0
        %1604 = vmatpush1.msra.mxu0 %v1175
        %1605 = vmatprep.subr.mxu0 0.0
        %1606 = vmatpush1.msra.mxu0 0.0
        %1607 = vmatprep.subr.mxu0 0.0
        %1608 = vmatpush1.msra.mxu0 0.0
        %1609 = vmatprep.subr.mxu0 0.0
        %1610 = vmatpush1.msra.mxu0 0.0
        %1611 = vmatprep.subr.mxu0 0.0
        %1612 = vmatpush1.msra.mxu0 0.0
        %1613 = vmatprep.subr.mxu0 0.0
        %1614 = vmatpush1.msra.mxu0 0.0
        %1615 = vmatprep.subr.mxu0 0.0
        %1616 = vmatpush1.msra.mxu0 0.0
        %1617 = vmatprep.subr.mxu0 0.0
        %1618 = vmatpush1.msra.mxu0 0.0
        %1619 = vmatprep.subr.mxu0 0.0
        %1620 = vmatpush1.msra.mxu0 0.0
        %1621 = vmatprep.subr.mxu0 0.0
        %1622 = vmatpush1.msra.mxu0 0.0
        %1623 = vmatprep.subr.mxu0 0.0
        %1624 = vmatpush1.msra.mxu0 0.0
        %1625 = vmatprep.subr.mxu0 0.0
        %1626 = vmatpush1.msra.mxu0 0.0
        %1627 = vmatprep.subr.mxu0 0.0
        %1628 = vmatpush1.msra.mxu0 0.0
        %1629 = vmatprep.subr.mxu0 0.0
        %1630 = vmatpush1.msra.mxu0 0.0
        %1631 = vmatprep.subr.mxu0 0.0
        %1632 = vmatpush1.msra.mxu0 0.0
        %1633 = vmatprep.subr.mxu0 0.0
        %1634 = vmatpush1.msra.mxu0 0.0
        %1635 = vmatprep.subr.mxu0 0.0
        %1636 = vmatpush1.msra.mxu0 0.0
        %1637 = vmatprep.subr.mxu0 0.0
        %1638 = vmatpush1.msra.mxu0 0.0
        %1639 = vmatprep.subr.mxu0 0.0
        %1640 = vmatpush1.msra.mxu0 0.0
        %1641 = vmatprep.subr.mxu0 0.0
        %1642 = vmatpush1.msra.mxu0 0.0
        %1643 = vmatprep.subr.mxu0 0.0
        %1644 = vmatpush1.msra.mxu0 0.0
        %1645 = vmatprep.subr.mxu0 0.0
        %1646 = vmatpush1.msra.mxu0 0.0
        %1647 = vmatprep.subr.mxu0 0.0
        %1648 = vmatpush1.msra.mxu0 0.0
        %1649 = vmatprep.subr.mxu0 0.0
        %1650 = vmatpush1.msra.mxu0 0.0
        %1651 = vmatprep.subr.mxu0 0.0
        %1652 = vmatpush1.msra.mxu0 0.0
        %1653 = vmatprep.subr.mxu0 0.0
        %1654 = vmatpush1.msra.mxu0 0.0
        %1655 = vmatprep.subr.mxu0 0.0
        %1656 = vmatpush1.msra.mxu0 0.0
        %1657 = vmatprep.subr.mxu0 0.0
        %1658 = vmatpush1.msra.mxu0 0.0
        %1659 = vmatprep.subr.mxu0 0.0
        %1660 = vmatpush1.msra.mxu0 0.0
        %1661 = vmatprep.subr.mxu0 0.0
        %1662 = vmatpush1.msra.mxu0 0.0
        %1663 = vmatprep.subr.mxu0 0.0
        %1664 = vmatpush1.msra.mxu0 0.0
        %1665 = vmatprep.subr.mxu0 0.0
        %1666 = vmatpush1.msra.mxu0 0.0
        %1667 = vmatprep.mubr.f32.mxu0 0.0
        %1668 = vmatmul.mubr.f32.gmra.mrb[0].mxu0 %v1601
        %v1669 = vpop.f32.mrb[0].mxu0
        %v1670 = vadd.f32 0.0, %v1669
        %v1671 = vpop.f32.mrb[0].mxu0
        %1672 = vdwg.mxu0
        %v1674 = vsel %vm1178, %v1525, 0
        %1676 = vmatprep.subr.mxu0 0.0
        %1677 = vmatpush1.msra.mxu0 %v1176
        %1678 = vmatprep.subr.mxu0 0.0
        %1679 = vmatpush1.msra.mxu0 0.0
        %1680 = vmatprep.subr.mxu0 0.0
        %1681 = vmatpush1.msra.mxu0 0.0
        %1682 = vmatprep.subr.mxu0 0.0
        %1683 = vmatpush1.msra.mxu0 0.0
        %1684 = vmatprep.subr.mxu0 0.0
        %1685 = vmatpush1.msra.mxu0 0.0
        %1686 = vmatprep.subr.mxu0 0.0
        %1687 = vmatpush1.msra.mxu0 0.0
        %1688 = vmatprep.subr.mxu0 0.0
        %1689 = vmatpush1.msra.mxu0 0.0
        %1690 = vmatprep.subr.mxu0 0.0
        %1691 = vmatpush1.msra.mxu0 0.0
        %1692 = vmatprep.subr.mxu0 0.0
        %1693 = vmatpush1.msra.mxu0 0.0
        %1694 = vmatprep.subr.mxu0 0.0
        %1695 = vmatpush1.msra.mxu0 0.0
        %1696 = vmatprep.subr.mxu0 0.0
        %1697 = vmatpush1.msra.mxu0 0.0
        %1698 = vmatprep.subr.mxu0 0.0
        %1699 = vmatpush1.msra.mxu0 0.0
        %1700 = vmatprep.subr.mxu0 0.0
        %1701 = vmatpush1.msra.mxu0 0.0
        %1702 = vmatprep.subr.mxu0 0.0
        %1703 = vmatpush1.msra.mxu0 0.0
        %1704 = vmatprep.subr.mxu0 0.0
        %1705 = vmatpush1.msra.mxu0 0.0
        %1706 = vmatprep.subr.mxu0 0.0
        %1707 = vmatpush1.msra.mxu0 0.0
        %1708 = vmatprep.subr.mxu0 0.0
        %1709 = vmatpush1.msra.mxu0 0.0
        %1710 = vmatprep.subr.mxu0 0.0
        %1711 = vmatpush1.msra.mxu0 0.0
        %1712 = vmatprep.subr.mxu0 0.0
        %1713 = vmatpush1.msra.mxu0 0.0
        %1714 = vmatprep.subr.mxu0 0.0
        %1715 = vmatpush1.msra.mxu0 0.0
        %1716 = vmatprep.subr.mxu0 0.0
        %1717 = vmatpush1.msra.mxu0 0.0
        %1718 = vmatprep.subr.mxu0 0.0
        %1719 = vmatpush1.msra.mxu0 0.0
        %1720 = vmatprep.subr.mxu0 0.0
        %1721 = vmatpush1.msra.mxu0 0.0
        %1722 = vmatprep.subr.mxu0 0.0
        %1723 = vmatpush1.msra.mxu0 0.0
        %1724 = vmatprep.subr.mxu0 0.0
        %1725 = vmatpush1.msra.mxu0 0.0
        %1726 = vmatprep.subr.mxu0 0.0
        %1727 = vmatpush1.msra.mxu0 0.0
        %1728 = vmatprep.subr.mxu0 0.0
        %1729 = vmatpush1.msra.mxu0 0.0
        %1730 = vmatprep.subr.mxu0 0.0
        %1731 = vmatpush1.msra.mxu0 0.0
        %1732 = vmatprep.subr.mxu0 0.0
        %1733 = vmatpush1.msra.mxu0 0.0
        %1734 = vmatprep.subr.mxu0 0.0
        %1735 = vmatpush1.msra.mxu0 0.0
        %1736 = vmatprep.subr.mxu0 0.0
        %1737 = vmatpush1.msra.mxu0 0.0
        %1738 = vmatprep.subr.mxu0 0.0
        %1739 = vmatpush1.msra.mxu0 0.0
        %1740 = vmatprep.mubr.f32.mxu0 0.0
        %1741 = vmatmul.mubr.f32.gmra.mrb[0].mxu0 %v1674
        %v1742 = vpop.f32.mrb[0].mxu0
        %v1743 = vadd.f32 0.0, %v1742
        %v1744 = vpop.f32.mrb[0].mxu0
        %1745 = vdwg.mxu0
        %v1747 = vsel %vm1178, %v1526, 0
        %1749 = vmatprep.subr.mxu0 0.0
        %1750 = vmatpush1.msra.mxu0 %v1177
        %1751 = vmatprep.subr.mxu0 0.0
        %1752 = vmatpush1.msra.mxu0 0.0
        %1753 = vmatprep.subr.mxu0 0.0
        %1754 = vmatpush1.msra.mxu0 0.0
        %1755 = vmatprep.subr.mxu0 0.0
        %1756 = vmatpush1.msra.mxu0 0.0
        %1757 = vmatprep.subr.mxu0 0.0
        %1758 = vmatpush1.msra.mxu0 0.0
        %1759 = vmatprep.subr.mxu0 0.0
        %1760 = vmatpush1.msra.mxu0 0.0
        %1761 = vmatprep.subr.mxu0 0.0
        %1762 = vmatpush1.msra.mxu0 0.0
        %1763 = vmatprep.subr.mxu0 0.0
        %1764 = vmatpush1.msra.mxu0 0.0
        %1765 = vmatprep.subr.mxu0 0.0
        %1766 = vmatpush1.msra.mxu0 0.0
        %1767 = vmatprep.subr.mxu0 0.0
        %1768 = vmatpush1.msra.mxu0 0.0
        %1769 = vmatprep.subr.mxu0 0.0
        %1770 = vmatpush1.msra.mxu0 0.0
        %1771 = vmatprep.subr.mxu0 0.0
        %1772 = vmatpush1.msra.mxu0 0.0
        %1773 = vmatprep.subr.mxu0 0.0
        %1774 = vmatpush1.msra.mxu0 0.0
        %1775 = vmatprep.subr.mxu0 0.0
        %1776 = vmatpush1.msra.mxu0 0.0
        %1777 = vmatprep.subr.mxu0 0.0
        %1778 = vmatpush1.msra.mxu0 0.0
        %1779 = vmatprep.subr.mxu0 0.0
        %1780 = vmatpush1.msra.mxu0 0.0
        %1781 = vmatprep.subr.mxu0 0.0
        %1782 = vmatpush1.msra.mxu0 0.0
        %1783 = vmatprep.subr.mxu0 0.0
        %1784 = vmatpush1.msra.mxu0 0.0
        %1785 = vmatprep.subr.mxu0 0.0
        %1786 = vmatpush1.msra.mxu0 0.0
        %1787 = vmatprep.subr.mxu0 0.0
        %1788 = vmatpush1.msra.mxu0 0.0
        %1789 = vmatprep.subr.mxu0 0.0
        %1790 = vmatpush1.msra.mxu0 0.0
        %1791 = vmatprep.subr.mxu0 0.0
        %1792 = vmatpush1.msra.mxu0 0.0
        %1793 = vmatprep.subr.mxu0 0.0
        %1794 = vmatpush1.msra.mxu0 0.0
        %1795 = vmatprep.subr.mxu0 0.0
        %1796 = vmatpush1.msra.mxu0 0.0
        %1797 = vmatprep.subr.mxu0 0.0
        %1798 = vmatpush1.msra.mxu0 0.0
        %1799 = vmatprep.subr.mxu0 0.0
        %1800 = vmatpush1.msra.mxu0 0.0
        %1801 = vmatprep.subr.mxu0 0.0
        %1802 = vmatpush1.msra.mxu0 0.0
        %1803 = vmatprep.subr.mxu0 0.0
        %1804 = vmatpush1.msra.mxu0 0.0
        %1805 = vmatprep.subr.mxu0 0.0
        %1806 = vmatpush1.msra.mxu0 0.0
        %1807 = vmatprep.subr.mxu0 0.0
        %1808 = vmatpush1.msra.mxu0 0.0
        %1809 = vmatprep.subr.mxu0 0.0
        %1810 = vmatpush1.msra.mxu0 0.0
        %1811 = vmatprep.subr.mxu0 0.0
        %1812 = vmatpush1.msra.mxu0 0.0
        %1813 = vmatprep.mubr.f32.mxu0 0.0
        %1814 = vmatmul.mubr.f32.gmra.mrb[0].mxu0 %v1747
        %v1815 = vpop.f32.mrb[0].mxu0
        %v1816 = vadd.f32 0.0, %v1815
        %v1817 = vpop.f32.mrb[0].mxu0
        %1818 = vdwg.mxu0
        %v1819 = vcombine.low %v1597, %v1743
        %v1820 = vcombine.high %v1597, %v1743
        %v1822 = vunpack.c.l.s4 1983009808
        %v1823 = vunpack.c.0.s8 %v1822
        %v1824 = vlaneseq
        %v1825 = vshrl.u32 %v1824, 7
        %v1826 = vsub.s32 %v1823, %v1825
        %v1827 = vrot.slane %v1819, %v1826
        %v1829 = vunpack.c.l.s4 1983009808
        %v1830 = vunpack.c.0.s8 %v1829
        %v1831 = vlaneseq
        %v1832 = vshrl.u32 %v1831, 7
        %v1833 = vsub.s32 %v1830, %v1832
        %v1834 = vrot.slane %v1820, %v1833
        %v1835 = vcombine.low %v1670, %v1816
        %v1836 = vcombine.high %v1670, %v1816
        %v1838 = vunpack.c.l.s4 1983009808
        %v1839 = vunpack.c.0.s8 %v1838
        %v1840 = vlaneseq
        %v1841 = vshrl.u32 %v1840, 7
        %v1842 = vsub.s32 %v1839, %v1841
        %v1843 = vrot.slane %v1835, %v1842
        %v1845 = vunpack.c.l.s4 1983009808
        %v1846 = vunpack.c.0.s8 %v1845
        %v1847 = vlaneseq
        %v1848 = vshrl.u32 %v1847, 7
        %v1849 = vsub.s32 %v1846, %v1848
        %v1850 = vrot.slane %v1836, %v1849
        %v1851 = vcombine.low %v1827, %v1843
        %v1852 = vcombine.high %v1827, %v1843
        %v1854 = vunpack.c.l.s4 1934713408
        %v1855 = vunpack.c.0.s8 %v1854
        %v1856 = vlaneseq
        %v1857 = vshrl.u32 %v1856, 7
        %v1858 = vsub.s32 %v1855, %v1857
        %v1859 = vrot.slane %v1851, %v1858
        %v1861 = vunpack.c.l.s4 1934713408
        %v1862 = vunpack.c.0.s8 %v1861
        %v1863 = vlaneseq
        %v1864 = vshrl.u32 %v1863, 7
        %v1865 = vsub.s32 %v1862, %v1864
        %v1866 = vrot.slane %v1852, %v1865
        %v1867 = vcombine.low %v1834, %v1850
        %v1868 = vcombine.high %v1834, %v1850
        %v1870 = vunpack.c.l.s4 1934713408
        %v1871 = vunpack.c.0.s8 %v1870
        %v1872 = vlaneseq
        %v1873 = vshrl.u32 %v1872, 7
        %v1874 = vsub.s32 %v1871, %v1873
        %v1875 = vrot.slane %v1867, %v1874
        %v1877 = vunpack.c.l.s4 1934713408
        %v1878 = vunpack.c.0.s8 %v1877
        %v1879 = vlaneseq
        %v1880 = vshrl.u32 %v1879, 7
        %v1881 = vsub.s32 %v1878, %v1880
        %v1882 = vrot.slane %v1868, %v1881
        %v1883 = vcombine.high %v1859, 0.0
        %v1884 = vcombine.high %v1866, 0.0
        %v1885 = vcombine.high %v1875, 0.0
        %v1886 = vcombine.high %v1882, 0.0
        %v1887 = vcombine.low %v1859, %v1866
        %v1889 = vunpack.c.l.s4 1983009808
        %v1890 = vunpack.c.0.s8 %v1889
        %v1891 = vlaneseq
        %v1892 = vshrl.u32 %v1891, 7
        %v1893 = vsub.s32 %v1890, %v1892
        %v1894 = vrot.slane %v1887, %v1893
        %v1895 = vcombine.low %v1883, %v1884
        %v1897 = vunpack.c.l.s4 1983009808
        %v1898 = vunpack.c.0.s8 %v1897
        %v1899 = vlaneseq
        %v1900 = vshrl.u32 %v1899, 7
        %v1901 = vsub.s32 %v1898, %v1900
        %v1902 = vrot.slane %v1895, %v1901
        %v1903 = vcombine.low %v1875, %v1882
        %v1905 = vunpack.c.l.s4 1983009808
        %v1906 = vunpack.c.0.s8 %v1905
        %v1907 = vlaneseq
        %v1908 = vshrl.u32 %v1907, 7
        %v1909 = vsub.s32 %v1906, %v1908
        %v1910 = vrot.slane %v1903, %v1909
        %v1911 = vcombine.low %v1885, %v1886
        %v1913 = vunpack.c.l.s4 1983009808
        %v1914 = vunpack.c.0.s8 %v1913
        %v1915 = vlaneseq
        %v1916 = vshrl.u32 %v1915, 7
        %v1917 = vsub.s32 %v1914, %v1916
        %v1918 = vrot.slane %v1911, %v1917
        %v1919 = vcombine.low %v1894, %v1902
        %v1920 = vcombine.high %v1894, %v1902
        %v1922 = vunpack.c.l.s4 1934713408
        %v1923 = vunpack.c.0.s8 %v1922
        %v1924 = vlaneseq
        %v1925 = vshrl.u32 %v1924, 7
        %v1926 = vsub.s32 %v1923, %v1925
        %v1927 = vrot.slane %v1919, %v1926
        %v1929 = vunpack.c.l.s4 1934713408
        %v1930 = vunpack.c.0.s8 %v1929
        %v1931 = vlaneseq
        %v1932 = vshrl.u32 %v1931, 7
        %v1933 = vsub.s32 %v1930, %v1932
        %v1934 = vrot.slane %v1920, %v1933
        %v1935 = vcombine.low %v1910, %v1918
        %v1936 = vcombine.high %v1910, %v1918
        %v1938 = vunpack.c.l.s4 1934713408
        %v1939 = vunpack.c.0.s8 %v1938
        %v1940 = vlaneseq
        %v1941 = vshrl.u32 %v1940, 7
        %v1942 = vsub.s32 %v1939, %v1941
        %v1943 = vrot.slane %v1935, %v1942
        %v1945 = vunpack.c.l.s4 1934713408
        %v1946 = vunpack.c.0.s8 %v1945
        %v1947 = vlaneseq
        %v1948 = vshrl.u32 %v1947, 7
        %v1949 = vsub.s32 %v1946, %v1948
        %v1950 = vrot.slane %v1936, %v1949
        %v1951 = vcombine.low %v1927, %v1943
        %v1952 = vcombine.high %v1927, %v1943
        %v1953 = vcombine.low %v1934, %v1950
        %v1954 = vcombine.high %v1934, %v1950
        %1956 = vrot.lane.b32.xlu0 %v1952, 8
        %v1957 = vpop.permute.xlu0 %1956
        %1960 = vrot.lane.b32.xlu0 %v1953, 16
        %v1961 = vpop.permute.xlu0 %1960
        %1964 = vrot.lane.b32.xlu0 %v1954, 24
        %v1965 = vpop.permute.xlu0 %1964
        %v1967 = vsel %vm1178, %v1951, %v1957
        %vm1968 = vcmask 130048
        %v1969 = vsel %vm1968, %v1967, %v1961
        %vm1970 = vcmask 195584
        %v1971 = vsel %vm1970, %v1969, %v1965
        %v1972 = vld [vmem:[%s6] sm:$0xff]
        %v1973 = vld [vmem:[%s6 + $0x8] sm:$0xff]
        %v1974 = vld [vmem:[%s6 + $0x10] sm:$0xff]
        %v1975 = vld [vmem:[%s6 + $0x18] sm:$0xff]
        %v1977 = vsel %vm486, %v1971, 0
        %1979 = vmatprep.subr.mxu0 0.0
        %1980 = vmatpush1.msra.mxu0 %v1972
        %1981 = vmatprep.subr.mxu0 0.0
        %1982 = vmatpush1.msra.mxu0 %v1973
        %1983 = vmatprep.subr.mxu0 0.0
        %1984 = vmatpush1.msra.mxu0 %v1974
        %1985 = vmatprep.subr.mxu0 0.0
        %1986 = vmatpush1.msra.mxu0 %v1975
        %1987 = vmatprep.subr.mxu0 0.0
        %1988 = vmatpush1.msra.mxu0 0.0
        %1989 = vmatprep.subr.mxu0 0.0
        %1990 = vmatpush1.msra.mxu0 0.0
        %1991 = vmatprep.subr.mxu0 0.0
        %1992 = vmatpush1.msra.mxu0 0.0
        %1993 = vmatprep.subr.mxu0 0.0
        %1994 = vmatpush1.msra.mxu0 0.0
        %1995 = vmatprep.subr.mxu0 0.0
        %1996 = vmatpush1.msra.mxu0 0.0
        %1997 = vmatprep.subr.mxu0 0.0
        %1998 = vmatpush1.msra.mxu0 0.0
        %1999 = vmatprep.subr.mxu0 0.0
        %2000 = vmatpush1.msra.mxu0 0.0
        %2001 = vmatprep.subr.mxu0 0.0
        %2002 = vmatpush1.msra.mxu0 0.0
        %2003 = vmatprep.subr.mxu0 0.0
        %2004 = vmatpush1.msra.mxu0 0.0
        %2005 = vmatprep.subr.mxu0 0.0
        %2006 = vmatpush1.msra.mxu0 0.0
        %2007 = vmatprep.subr.mxu0 0.0
        %2008 = vmatpush1.msra.mxu0 0.0
        %2009 = vmatprep.subr.mxu0 0.0
        %2010 = vmatpush1.msra.mxu0 0.0
        %2011 = vmatprep.subr.mxu0 0.0
        %2012 = vmatpush1.msra.mxu0 0.0
        %2013 = vmatprep.subr.mxu0 0.0
        %2014 = vmatpush1.msra.mxu0 0.0
        %2015 = vmatprep.subr.mxu0 0.0
        %2016 = vmatpush1.msra.mxu0 0.0
        %2017 = vmatprep.subr.mxu0 0.0
        %2018 = vmatpush1.msra.mxu0 0.0
        %2019 = vmatprep.subr.mxu0 0.0
        %2020 = vmatpush1.msra.mxu0 0.0
        %2021 = vmatprep.subr.mxu0 0.0
        %2022 = vmatpush1.msra.mxu0 0.0
        %2023 = vmatprep.subr.mxu0 0.0
        %2024 = vmatpush1.msra.mxu0 0.0
        %2025 = vmatprep.subr.mxu0 0.0
        %2026 = vmatpush1.msra.mxu0 0.0
        %2027 = vmatprep.subr.mxu0 0.0
        %2028 = vmatpush1.msra.mxu0 0.0
        %2029 = vmatprep.subr.mxu0 0.0
        %2030 = vmatpush1.msra.mxu0 0.0
        %2031 = vmatprep.subr.mxu0 0.0
        %2032 = vmatpush1.msra.mxu0 0.0
        %2033 = vmatprep.subr.mxu0 0.0
        %2034 = vmatpush1.msra.mxu0 0.0
        %2035 = vmatprep.subr.mxu0 0.0
        %2036 = vmatpush1.msra.mxu0 0.0
        %2037 = vmatprep.subr.mxu0 0.0
        %2038 = vmatpush1.msra.mxu0 0.0
        %2039 = vmatprep.subr.mxu0 0.0
        %2040 = vmatpush1.msra.mxu0 0.0
        %2041 = vmatprep.subr.mxu0 0.0
        %2042 = vmatpush1.msra.mxu0 0.0
        %2043 = vmatprep.mubr.f32.mxu0 0.0
        %2044 = vmatmul.mubr.f32.gmra.mrb[0].mxu0 %v1977
        %v2045 = vpop.f32.mrb[0].mxu0
        %v2046 = vadd.f32 0.0, %v2045
        %v2047 = vpop.f32.mrb[0].mxu0
        %2048 = vdwg.mxu0
        %v2049 = vadd.f32 %v483, %v2046
        %v2050 = vld [vmem:[%s7] sm:$0x1]
        %v2052 = vlaneseq
        %v2053 = vshrl.u32 %v2052, 7
        %v2054 = vsub.s32 0, %v2053
        %v2055 = vrot.slane %v2050, %v2054
        %v2057 = vadd.f32 %v2049, %v2055
        %v2058 = vld [vmem:[%s8] sm:$0x1]
        %v2059 = vld [vmem:[%s9] sm:$0x1]
        %v2060 = vsel %vm486, %v2057, 0.0
        %2061 = vadd.xlane.f32.xlu0 %v2060
        %v2062 = vpop.xlane.xlu0 %2061
        %v2063 = vmul.f32 %v2062, %v490
        %v2064 = vsub.f32 %v2057, %v2063
        %v2065 = vmul.f32 %v2064, %v2064
        %v2066 = vsel %vm486, %v2065, 0.0
        %2067 = vadd.xlane.f32.xlu0 %v2066
        %v2068 = vpop.xlane.xlu0 %2067
        %v2069 = vmul.f32 %v2068, %v490
        %v2070 = vadd.f32 %v2069, 1e-05
        %v2071 = vrsqrt.pop %v2070
        %v2072 = vmul.f32 %v2064, %v2071
        %v2074 = vlaneseq
        %v2075 = vshrl.u32 %v2074, 7
        %v2076 = vsub.s32 0, %v2075
        %v2077 = vrot.slane %v2058, %v2076
        %v2079 = vmul.f32 %v2072, %v2077
        %v2081 = vlaneseq
        %v2082 = vshrl.u32 %v2081, 7
        %v2083 = vsub.s32 0, %v2082
        %v2084 = vrot.slane %v2059, %v2083
        %v2086 = vadd.f32 %v2079, %v2084
        %v2087 = vld [vmem:[%s10] sm:$0xff]
        %v2088 = vld [vmem:[%s10 + $0x8] sm:$0xff]
        %v2089 = vld [vmem:[%s10 + $0x10] sm:$0xff]
        %v2090 = vld [vmem:[%s10 + $0x18] sm:$0xff]
        %v2091 = vld [vmem:[%s11] sm:$0x1]
        %v2093 = vlaneseq
        %v2094 = vshrl.u32 %v2093, 7
        %v2095 = vsub.s32 0, %v2094
        %v2096 = vrot.slane %v2091, %v2095
        %v2099 = vsel %vm486, %v2086, 0
        %2101 = vmatprep.subr.mxu0 0.0
        %2102 = vmatpush1.msra.mxu0 %v2087
        %2103 = vmatprep.subr.mxu0 0.0
        %2104 = vmatpush1.msra.mxu0 %v2088
        %2105 = vmatprep.subr.mxu0 0.0
        %2106 = vmatpush1.msra.mxu0 %v2089
        %2107 = vmatprep.subr.mxu0 0.0
        %2108 = vmatpush1.msra.mxu0 %v2090
        %2109 = vmatprep.subr.mxu0 0.0
        %2110 = vmatpush1.msra.mxu0 0.0
        %2111 = vmatprep.subr.mxu0 0.0
        %2112 = vmatpush1.msra.mxu0 0.0
        %2113 = vmatprep.subr.mxu0 0.0
        %2114 = vmatpush1.msra.mxu0 0.0
        %2115 = vmatprep.subr.mxu0 0.0
        %2116 = vmatpush1.msra.mxu0 0.0
        %2117 = vmatprep.subr.mxu0 0.0
        %2118 = vmatpush1.msra.mxu0 0.0
        %2119 = vmatprep.subr.mxu0 0.0
        %2120 = vmatpush1.msra.mxu0 0.0
        %2121 = vmatprep.subr.mxu0 0.0
        %2122 = vmatpush1.msra.mxu0 0.0
        %2123 = vmatprep.subr.mxu0 0.0
        %2124 = vmatpush1.msra.mxu0 0.0
        %2125 = vmatprep.subr.mxu0 0.0
        %2126 = vmatpush1.msra.mxu0 0.0
        %2127 = vmatprep.subr.mxu0 0.0
        %2128 = vmatpush1.msra.mxu0 0.0
        %2129 = vmatprep.subr.mxu0 0.0
        %2130 = vmatpush1.msra.mxu0 0.0
        %2131 = vmatprep.subr.mxu0 0.0
        %2132 = vmatpush1.msra.mxu0 0.0
        %2133 = vmatprep.subr.mxu0 0.0
        %2134 = vmatpush1.msra.mxu0 0.0
        %2135 = vmatprep.subr.mxu0 0.0
        %2136 = vmatpush1.msra.mxu0 0.0
        %2137 = vmatprep.subr.mxu0 0.0
        %2138 = vmatpush1.msra.mxu0 0.0
        %2139 = vmatprep.subr.mxu0 0.0
        %2140 = vmatpush1.msra.mxu0 0.0
        %2141 = vmatprep.subr.mxu0 0.0
        %2142 = vmatpush1.msra.mxu0 0.0
        %2143 = vmatprep.subr.mxu0 0.0
        %2144 = vmatpush1.msra.mxu0 0.0
        %2145 = vmatprep.subr.mxu0 0.0
        %2146 = vmatpush1.msra.mxu0 0.0
        %2147 = vmatprep.subr.mxu0 0.0
        %2148 = vmatpush1.msra.mxu0 0.0
        %2149 = vmatprep.subr.mxu0 0.0
        %2150 = vmatpush1.msra.mxu0 0.0
        %2151 = vmatprep.subr.mxu0 0.0
        %2152 = vmatpush1.msra.mxu0 0.0
        %2153 = vmatprep.subr.mxu0 0.0
        %2154 = vmatpush1.msra.mxu0 0.0
        %2155 = vmatprep.subr.mxu0 0.0
        %2156 = vmatpush1.msra.mxu0 0.0
        %2157 = vmatprep.subr.mxu0 0.0
        %2158 = vmatpush1.msra.mxu0 0.0
        %2159 = vmatprep.subr.mxu0 0.0
        %2160 = vmatpush1.msra.mxu0 0.0
        %2161 = vmatprep.subr.mxu0 0.0
        %2162 = vmatpush1.msra.mxu0 0.0
        %2163 = vmatprep.subr.mxu0 0.0
        %2164 = vmatpush1.msra.mxu0 0.0
        %2165 = vmatprep.mubr.f32.mxu0 0.0
        %2166 = vmatmul.mubr.f32.gmra.mrb[0].mxu0 %v2099
        %v2167 = vpop.f32.mrb[0].mxu0
        %v2168 = vadd.f32 %v2096, %v2167
        %v2169 = vpop.f32.mrb[0].mxu0
        %2170 = vdwg.mxu0
        %v2171 = vmul.f32 %v2168, 0.5
        %v2172 = vmul.f32 %v2168, 0.70710677
        %v2173 = vand.u32 2147483647, %v2172
        %v2174 = vmul.f32 %v2173, 0.3275911
        %v2175 = vadd.f32 %v2174, 1.0
        %v2176 = vrcp.pop %v2175
        %v2177 = vmul.f32 %v2176, 1.0614054
        %v2178 = vadd.f32 %v2177, -1.4531521
        %v2179 = vmul.f32 %v2178, %v2176
        %v2180 = vadd.f32 %v2179, 1.4214138
        %v2181 = vmul.f32 %v2180, %v2176
        %v2182 = vadd.f32 %v2181, -0.28449672
        %v2183 = vmul.f32 %v2182, %v2176
        %v2184 = vadd.f32 %v2183, 0.2548296
        %v2185 = vmul.f32 %v2184, %v2176
        %v2186 = vsub.f32 0.0, %v2173
        %v2187 = vmul.f32 %v2186, %v2173
        %v2188 = vmul.f32 %v2187, 1.442695
        %v2189 = vpow.pop %v2188
        %v2190 = vmul.f32 %v2185, %v2189
        %v2191 = vsub.f32 1.0, %v2190
        %vm2192 = vcmp.ge.f32.partialorder %v2172, 0.0
        %v2193 = vsub.f32 0.0, %v2191
        %v2194 = vsel %vm2192, %v2191, %v2193
        %v2195 = vadd.f32 %v2194, 1.0
        %v2196 = vmul.f32 %v2171, %v2195
        %v2197 = vld [vmem:[%s12] sm:$0xff]
        %v2198 = vld [vmem:[%s12 + $0x8] sm:$0xff]
        %v2199 = vld [vmem:[%s12 + $0x10] sm:$0xff]
        %v2200 = vld [vmem:[%s12 + $0x18] sm:$0xff]
        %v2201 = vld [vmem:[%s12 + $0x20] sm:$0xff]
        %v2202 = vld [vmem:[%s12 + $0x28] sm:$0xff]
        %v2203 = vld [vmem:[%s12 + $0x30] sm:$0xff]
        %v2204 = vld [vmem:[%s12 + $0x38] sm:$0xff]
        %v2205 = vld [vmem:[%s12 + $0x40] sm:$0xff]
        %v2206 = vld [vmem:[%s12 + $0x48] sm:$0xff]
        %v2207 = vld [vmem:[%s12 + $0x50] sm:$0xff]
        %v2208 = vld [vmem:[%s12 + $0x58] sm:$0xff]
        %v2209 = vld [vmem:[%s12 + $0x60] sm:$0xff]
        %v2210 = vld [vmem:[%s12 + $0x68] sm:$0xff]
        %v2211 = vld [vmem:[%s12 + $0x70] sm:$0xff]
        %v2212 = vld [vmem:[%s12 + $0x78] sm:$0xff]
        %2213 = vmatprep.subr.mxu0 0.0
        %2214 = vmatpush1.msra.mxu0 %v2197
        %2215 = vmatprep.subr.mxu0 0.0
        %2216 = vmatpush1.msra.mxu0 %v2198
        %2217 = vmatprep.subr.mxu0 0.0
        %2218 = vmatpush1.msra.mxu0 %v2199
        %2219 = vmatprep.subr.mxu0 0.0
        %2220 = vmatpush1.msra.mxu0 %v2200
        %2221 = vmatprep.subr.mxu0 0.0
        %2222 = vmatpush1.msra.mxu0 %v2201
        %2223 = vmatprep.subr.mxu0 0.0
        %2224 = vmatpush1.msra.mxu0 %v2202
        %2225 = vmatprep.subr.mxu0 0.0
        %2226 = vmatpush1.msra.mxu0 %v2203
        %2227 = vmatprep.subr.mxu0 0.0
        %2228 = vmatpush1.msra.mxu0 %v2204
        %2229 = vmatprep.subr.mxu0 0.0
        %2230 = vmatpush1.msra.mxu0 %v2205
        %2231 = vmatprep.subr.mxu0 0.0
        %2232 = vmatpush1.msra.mxu0 %v2206
        %2233 = vmatprep.subr.mxu0 0.0
        %2234 = vmatpush1.msra.mxu0 %v2207
        %2235 = vmatprep.subr.mxu0 0.0
        %2236 = vmatpush1.msra.mxu0 %v2208
        %2237 = vmatprep.subr.mxu0 0.0
        %2238 = vmatpush1.msra.mxu0 %v2209
        %2239 = vmatprep.subr.mxu0 0.0
        %2240 = vmatpush1.msra.mxu0 %v2210
        %2241 = vmatprep.subr.mxu0 0.0
        %2242 = vmatpush1.msra.mxu0 %v2211
        %2243 = vmatprep.subr.mxu0 0.0
        %2244 = vmatpush1.msra.mxu0 %v2212
        %2245 = vmatprep.subr.mxu0 0.0
        %2246 = vmatpush1.msra.mxu0 0.0
        %2247 = vmatprep.subr.mxu0 0.0
        %2248 = vmatpush1.msra.mxu0 0.0
        %2249 = vmatprep.subr.mxu0 0.0
        %2250 = vmatpush1.msra.mxu0 0.0
        %2251 = vmatprep.subr.mxu0 0.0
        %2252 = vmatpush1.msra.mxu0 0.0
        %2253 = vmatprep.subr.mxu0 0.0
        %2254 = vmatpush1.msra.mxu0 0.0
        %2255 = vmatprep.subr.mxu0 0.0
        %2256 = vmatpush1.msra.mxu0 0.0
        %2257 = vmatprep.subr.mxu0 0.0
        %2258 = vmatpush1.msra.mxu0 0.0
        %2259 = vmatprep.subr.mxu0 0.0
        %2260 = vmatpush1.msra.mxu0 0.0
        %2261 = vmatprep.subr.mxu0 0.0
        %2262 = vmatpush1.msra.mxu0 0.0
        %2263 = vmatprep.subr.mxu0 0.0
        %2264 = vmatpush1.msra.mxu0 0.0
        %2265 = vmatprep.subr.mxu0 0.0
        %2266 = vmatpush1.msra.mxu0 0.0
        %2267 = vmatprep.subr.mxu0 0.0
        %2268 = vmatpush1.msra.mxu0 0.0
        %2269 = vmatprep.subr.mxu0 0.0
        %2270 = vmatpush1.msra.mxu0 0.0
        %2271 = vmatprep.subr.mxu0 0.0
        %2272 = vmatpush1.msra.mxu0 0.0
        %2273 = vmatprep.subr.mxu0 0.0
        %2274 = vmatpush1.msra.mxu0 0.0
        %2275 = vmatprep.subr.mxu0 0.0
        %2276 = vmatpush1.msra.mxu0 0.0
        %2277 = vmatprep.mubr.f32.mxu0 0.0
        %2278 = vmatmul.mubr.f32.gmra.mrb[0].mxu0 %v2196
        %v2279 = vpop.f32.mrb[0].mxu0
        %v2280 = vadd.f32 0.0, %v2279
        %v2281 = vpop.f32.mrb[0].mxu0
        %2282 = vdwg.mxu0
        %v2283 = vadd.f32 %v2057, %v2280
        %v2284 = vld [vmem:[%s13] sm:$0x1]
        %v2286 = vlaneseq
        %v2287 = vshrl.u32 %v2286, 7
        %v2288 = vsub.s32 0, %v2287
        %v2289 = vrot.slane %v2284, %v2288
        %v2291 = vadd.f32 %v2283, %v2289
        %2292 = vst.msk [vmem:[%s482] sm:$0xff] %vm486, %v2291
        %s2293 = sand.u32 %s338, 1
        %s2294 = scalar_lea.sflag [#allocation4], %s2293
        %s2295 = sand.u32 %s338, 1
        %s2296 = smul.addr %s2295, 8
        %s2297 = scalar_lea.vmem [#allocation5], %s2296
        // Predicated region
        $region81: #{tpu_custom_call.1} parent=75 // pred_check
          %p2298 = pneg %p348
        $region82: #{tpu_custom_call.1} parent=75 // pred_check_branch
          %2300 = sbr.rel (%p2298) target = $region84
        $region83: #{tpu_custom_call.1} parent=75 // pred_region
          %s2302 = ssub.s32 128, 128
          %2303 = vsyncadd %s2294, %s2302
          %s2304 = smul.addr %s31, 128
          %s2305 = scalar_lea.hbm %s14, %s2304
          %s2307 = sshll.u32 %s2297, 4
          %s2308 = int_to_ptr.vmem [resolvable:$true] %s2307
          %2310 = dma.vmem_to_hbm [thread:$0]  %s2308, 128, %s2305, %s2294
        $region84: #{tpu_custom_call.1} parent=75 // pred_fallthru
          _
      $region76: #{tpu_custom_call.1} parent=5 // pred_fallthru
        _
      %p2311 = scmp.le.s32.totalorder 2, %s26
      // Predicated region
      $region85: #{tpu_custom_call.1} parent=5 // pred_check
        %p2312 = pneg %p2311
      $region86: #{tpu_custom_call.1} parent=5 // pred_check_branch
        %2314 = sbr.rel (%p2312) target = $region88
      $region87: #{tpu_custom_call.1} parent=5 // pred_region
        %s2315 = ssub.s32 %s26, 2
        // Predicated region
        $region89: #{tpu_custom_call.1} parent=87 // pred_check
          %p2316 = pneg %p354
        $region90: #{tpu_custom_call.1} parent=87 // pred_check_branch
          %2318 = sbr.rel (%p2316) target = $region92
        $region91: #{tpu_custom_call.1} parent=87 // pred_region
          %s2319 = sand.u32 %s339, 1
          %s2320 = scalar_lea.sflag [#allocation4], %s2319
          %s2321 = sand.u32 %s339, 1
          %s2322 = smul.addr %s2321, 8
          %s2323 = scalar_lea.vmem [#allocation5], %s2322
          %2324 = dma.done %s2320, 128
        $region92: #{tpu_custom_call.1} parent=87 // pred_fallthru
          _
      $region88: #{tpu_custom_call.1} parent=5 // pred_fallthru
        _
    $region6: #{tpu_custom_call.1} parent=1 // loop_footer
      %s30 = sadd.s32 1, %s26
    $region7: #{tpu_custom_call.1} parent=1 // loop_footer_branch
      %25 = sbr.rel target = $region3
    $region8: #{tpu_custom_call.1} parent=1 // loop_exit
      _
    %2325 = vsyncpa [#allocation3], 1
    %s2326 = scalar_lea.sflag [#allocation3], 1
    %2327 = vsyncpa %s2326, 1
    %2328 = vsyncpa [#allocation4], 1
    %s2329 = scalar_lea.sflag [#allocation4], 1
    %2330 = vsyncpa %s2329, 1

</llo_original>
